<compile_context>
chip_gen: v7x
topology: tpu7x:2x2x1
jax: 0.10.0
libtpu: 0.0.40
codegen_flags: <defaults>
</compile_context>

<pallas_src>
import functools
import math

import jax
import jax.numpy as jnp
from jax import lax
from jax.experimental import pallas as pl
from jax.experimental.pallas import tpu as pltpu


# ------------------------- in-kernel helpers -------------------------

def _mm(a, b):
    """MXU matmul: bf16 inputs, f32 accumulation."""
    return jnp.dot(a.astype(jnp.bfloat16), b.astype(jnp.bfloat16),
                   preferred_element_type=jnp.float32)


def _mm_nt(a, b):
    """a @ b.T contracting the last dims of both operands (no explicit transpose)."""
    return lax.dot_general(a.astype(jnp.bfloat16), b.astype(jnp.bfloat16),
                           (((1,), (1,)), ((), ())),
                           preferred_element_type=jnp.float32)


def _layernorm(x, g, b, eps=1e-12):
    mean = jnp.mean(x, axis=-1, keepdims=True)
    xc = x - mean
    var = jnp.mean(xc * xc, axis=-1, keepdims=True)
    return xc * lax.rsqrt(var + eps) * g + b


def _gelu(x):
    # TODO(synk): HF BertIntermediate uses exact erf-based GELU; tanh approximation used here
    # (no guaranteed erf lowering in Mosaic) -> ~1e-3-level deviation vs PyTorch reference.
    c = math.sqrt(2.0 / math.pi)
    return 0.5 * x * (1.0 + jnp.tanh(c * (x + 0.044715 * x * x * x)))


# ------------------------- fused per-(batch, layer) kernel -------------------------

def _bert_kernel(emb_ref, mbias_ref,
                 emb_g_ref, emb_b_ref,
                 wqkv_ref, bqkv_ref, wo_ref, bo_ref,
                 ln1g_ref, ln1b_ref,
                 w1_ref, b1_ref, w2_ref, b2_ref,
                 ln2g_ref, ln2b_ref,
                 wp_ref, bp_ref,
                 out_ref,
                 h_scr,
                 *, n_heads, head_dim):
    l = pl.program_id(1)
    n_layers = pl.num_programs(1)
    H = n_heads * head_dim
    S = h_scr.shape[0]

    # ---- layer-0 prologue: embedding LayerNorm into the VMEM-resident carry ----
    @pl.when(l == 0)
    def _():
        h_scr[...] = _layernorm(emb_ref[...], emb_g_ref[...], emb_b_ref[...])

    h = h_scr[...]                                                   # [S, H] f32

    # ---- self-attention ----
    # One fused [S,H]x[H,3H] QKV matmul (contracts K=H -> full MXU fill).
    # 1/sqrt(head_dim) is already folded into the packed Q weight/bias.
    qkv = _mm(h, wqkv_ref[...]) + bqkv_ref[...]                      # [S, 3H] f32

    # Hoist the [1,S] -> [S,S] mask broadcast once per layer (JAX does not CSE it).
    mbias = jnp.broadcast_to(mbias_ref[...], (S, S))                 # [S, S] f32

    # Per-head softmax(QK^T)V (scores inherently contract K=head_dim); contexts are
    # concatenated back to [S,H] so the output projection is ONE K=H matmul.
    ctx_parts = []
    for hd in range(n_heads):                                        # small static unroll
        lo = hd * head_dim
        q = qkv[:, lo:lo + head_dim]                                 # [S, dh]
        k = qkv[:, H + lo:H + lo + head_dim]
        v = qkv[:, 2 * H + lo:2 * H + lo + head_dim]
        s = _mm_nt(q, k) + mbias                                     # [S, S] f32
        m = jnp.max(s, axis=-1, keepdims=True)
        p = jnp.exp(s - m)
        p = p * pl.reciprocal(jnp.sum(p, axis=-1, keepdims=True), approx=True)
        ctx_parts.append(_mm(p, v))                                  # [S, dh]
    ctx = jnp.concatenate(ctx_parts, axis=-1)                        # [S, H]

    attn = _mm(ctx, wo_ref[...]) + bo_ref[...]                       # single [S,H]x[H,H]
    h = _layernorm(h + attn, ln1g_ref[...], ln1b_ref[...])

    # ---- feed-forward with GELU, residual+LN ----
    x1 = _gelu(_mm(h, w1_ref[...]) + b1_ref[...])                    # [S, I]
    x2 = _mm(x1, w2_ref[...]) + b2_ref[...]                          # [S, H]
    h = _layernorm(h + x2, ln2g_ref[...], ln2b_ref[...])
    h_scr[...] = h                                                   # carry to next layer

    # ---- pooler epilogue on the CLS row only ----
    @pl.when(l == n_layers - 1)
    def _():
        cls = h[0:1, :]                                              # [1, H]
        out_ref[...] = jnp.tanh(_mm(cls, wp_ref[...]) + bp_ref[...])


# ------------------------- parameter init -------------------------

def init_params(key, vocab=100, max_pos=16, type_vocab=2, H=32, nH=4, I=64, L=2):
    def nrm(k, shape):
        return 0.02 * jax.random.normal(k, shape, jnp.float32)

    n_keys = 4 + L * 6
    keys = iter(jax.random.split(key, n_keys))
    p = {
        "word_emb": nrm(next(keys), (vocab, H)),
        "pos_emb":  nrm(next(keys), (max_pos, H)),
        "type_emb": nrm(next(keys), (type_vocab, H)),
        "emb_ln_g": jnp.ones((H,), jnp.float32),
        "emb_ln_b": jnp.zeros((H,), jnp.float32),
        "wp": nrm(next(keys), (H, H)),
        "bp": jnp.zeros((H,), jnp.float32),
        "layers": [],
    }
    for _ in range(L):
        lp = {
            "wq": nrm(next(keys), (H, H)), "bq": jnp.zeros((H,), jnp.float32),
            "wk": nrm(next(keys), (H, H)), "bk": jnp.zeros((H,), jnp.float32),
            "wv": nrm(next(keys), (H, H)), "bv": jnp.zeros((H,), jnp.float32),
            "wo": nrm(next(keys), (H, H)), "bo": jnp.zeros((H,), jnp.float32),
            "ln1_g": jnp.ones((H,), jnp.float32), "ln1_b": jnp.zeros((H,), jnp.float32),
            "w1": nrm(next(keys), (H, I)), "b1": jnp.zeros((I,), jnp.float32),
            "w2": nrm(next(keys), (I, H)), "b2": jnp.zeros((H,), jnp.float32),
            "ln2_g": jnp.ones((H,), jnp.float32), "ln2_b": jnp.zeros((H,), jnp.float32),
        }
        p["layers"].append(lp)
    return p, nH


# ------------------------- forward (BertEncoder.forward) -------------------------

def bert_encoder_forward(params, n_heads, x_ids, x_mask):
    """Equivalent of `BertModel(x, attention_mask=x_mask)[1]` (pooled [CLS] output)."""
    B, S = x_ids.shape
    H = params["word_emb"].shape[1]
    layers = params["layers"]
    L = len(layers)
    inter = layers[0]["w1"].shape[1]
    dh = H // n_heads
    bf16 = jnp.bfloat16
    scale = 1.0 / math.sqrt(dh)

    # Embeddings: word + position + token_type(all zeros). Gather is plain-JAX glue;
    # the embedding LayerNorm runs inside the fused kernel.
    emb = (jnp.take(params["word_emb"], x_ids, axis=0)
           + params["pos_emb"][None, :S, :]
           + params["type_emb"][0][None, None, :])                       # [B, S, H] f32

    # Extended attention mask (HF convention): (1 - mask) * -10000.0, kept in f32.
    mask_bias = ((1.0 - x_mask.astype(jnp.float32)) * -10000.0).reshape(B, 1, S)

    # Pack per-layer parameters: Q|K|V fused (1/sqrt(dh) folded into Q), bf16 weights
    # for the MXU, biases/LN in f32.
    wqkv = jnp.stack([jnp.concatenate([lp["wq"] * scale, lp["wk"], lp["wv"]], axis=1)
                      for lp in layers]).astype(bf16)                    # [L, H, 3H]
    bqkv = jnp.stack([jnp.concatenate([lp["bq"] * scale, lp["bk"], lp["bv"]])[None, :]
                      for lp in layers])                                 # [L, 1, 3H]
    wo = jnp.stack([lp["wo"] for lp in layers]).astype(bf16)             # [L, H, H]
    bo = jnp.stack([lp["bo"][None, :] for lp in layers])                 # [L, 1, H]
    ln1g = jnp.stack([lp["ln1_g"][None, :] for lp in layers])            # [L, 1, H]
    ln1b = jnp.stack([lp["ln1_b"][None, :] for lp in layers])
    w1 = jnp.stack([lp["w1"] for lp in layers]).astype(bf16)             # [L, H, I]
    b1 = jnp.stack([lp["b1"][None, :] for lp in layers])                 # [L, 1, I]
    w2 = jnp.stack([lp["w2"] for lp in layers]).astype(bf16)             # [L, I, H]
    b2 = jnp.stack([lp["b2"][None, :] for lp in layers])                 # [L, 1, H]
    ln2g = jnp.stack([lp["ln2_g"][None, :] for lp in layers])
    ln2b = jnp.stack([lp["ln2_b"][None, :] for lp in layers])
    wp = params["wp"].astype(bf16)                                       # [H, H]
    bp = params["bp"][None, :]                                           # [1, H]
    emb_g = params["emb_ln_g"][None, :]                                  # [1, H]
    emb_b = params["emb_ln_b"][None, :]

    kernel = functools.partial(_bert_kernel, n_heads=n_heads, head_dim=dh)

    def per_layer(shape):
        # Indexed by the layer grid axis -> only current layer (+ prefetch) in VMEM.
        return pl.BlockSpec((None,) + shape, lambda b, l: (l,) + (0,) * len(shape))

    def const(shape):
        # Same block every grid step -> fetched once, stays VMEM-resident.
        return pl.BlockSpec(shape, lambda b, l: (0,) * len(shape))

    # Advisory cost estimate for XLA's scheduler.
    flops = B * L * (2 * S * H * 3 * H + 4 * S * S * H + 2 * S * H * H + 4 * S * H * inter) \
        + B * 2 * H * H
    transc = B * L * (n_heads * S * S + S * inter) + B * H
    bytes_acc = (emb.size * 4 + mask_bias.size * 4 + B * H * 4
                 + 2 * L * (H * 3 * H + H * H + 2 * H * inter)
                 + 4 * L * (3 * H + 6 * H + inter) + 4 * (H * H + 3 * H))

    out = pl.pallas_call(
        kernel,
        out_shape=jax.ShapeDtypeStruct((B, 1, H), jnp.float32),
        grid=(B, L),
        in_specs=[
            pl.BlockSpec((None, S, H), lambda b, l: (b, 0, 0)),          # embeddings [S, H]
            pl.BlockSpec((None, 1, S), lambda b, l: (b, 0, 0)),          # mask bias  [1, S]
            const((1, H)), const((1, H)),                                # emb LN
            per_layer((H, 3 * H)), per_layer((1, 3 * H)),                # fused QKV
            per_layer((H, H)), per_layer((1, H)),                        # attn out proj
            per_layer((1, H)), per_layer((1, H)),                        # LN1
            per_layer((H, inter)), per_layer((1, inter)),                # FFN in
            per_layer((inter, H)), per_layer((1, H)),                    # FFN out
            per_layer((1, H)), per_layer((1, H)),                        # LN2
            const((H, H)), const((1, H)),                                # pooler
        ],
        out_specs=pl.BlockSpec((None, 1, H), lambda b, l: (b, 0, 0)),
        scratch_shapes=[pltpu.VMEM((S, H), jnp.float32)],                # hidden-state carry
        compiler_params=pltpu.CompilerParams(
            dimension_semantics=("parallel", "arbitrary")),              # batch || ; layers seq
        cost_estimate=pl.CostEstimate(flops=flops, transcendentals=transc,
                                      bytes_accessed=bytes_acc),
    )(emb, mask_bias, emb_g, emb_b, wqkv, bqkv, wo, bo,
      ln1g, ln1b, w1, b1, w2, b2, ln2g, ln2b, wp, bp)
    return out.reshape(B, H)


# ------------------------- main -------------------------

if __name__ == "__main__":
    key = jax.random.PRNGKey(0)
    k_params, k_ids = jax.random.split(key)

    params, n_heads = init_params(k_params, vocab=100, max_pos=16, H=32, nH=4, I=64, L=2)

    B, S = 2, 8
    x = jax.random.randint(k_ids, (B, S), 0, 100, dtype=jnp.int32)   # token ids
    x_mask = jnp.ones((B, S), jnp.float32).at[1, 6:].set(0.0)        # some padding in seq 1

    out = bert_encoder_forward(params, n_heads, x, x_mask)
    out = jax.block_until_ready(out)
    assert out.shape == (B, 32) and out.dtype == jnp.float32
    assert bool(jnp.all(jnp.isfinite(out)))
    print("KERNEL_OK")
</pallas_src>

<mosaic_0001>
module attributes {stable_mosaic.version = 11 : i64} {
  func.func @_bert_kernel(%arg0: i32, %arg1: i32, %arg2: memref<1x8x32xf32, #tpu.memory_space<vmem>>, %arg3: memref<1x1x8xf32, #tpu.memory_space<vmem>>, %arg4: memref<1x32xf32, #tpu.memory_space<vmem>>, %arg5: memref<1x32xf32, #tpu.memory_space<vmem>>, %arg6: memref<1x32x96xbf16, #tpu.memory_space<vmem>>, %arg7: memref<1x1x96xf32, #tpu.memory_space<vmem>>, %arg8: memref<1x32x32xbf16, #tpu.memory_space<vmem>>, %arg9: memref<1x1x32xf32, #tpu.memory_space<vmem>>, %arg10: memref<1x1x32xf32, #tpu.memory_space<vmem>>, %arg11: memref<1x1x32xf32, #tpu.memory_space<vmem>>, %arg12: memref<1x32x64xbf16, #tpu.memory_space<vmem>>, %arg13: memref<1x1x64xf32, #tpu.memory_space<vmem>>, %arg14: memref<1x64x32xbf16, #tpu.memory_space<vmem>>, %arg15: memref<1x1x32xf32, #tpu.memory_space<vmem>>, %arg16: memref<1x1x32xf32, #tpu.memory_space<vmem>>, %arg17: memref<1x1x32xf32, #tpu.memory_space<vmem>>, %arg18: memref<32x32xbf16, #tpu.memory_space<vmem>>, %arg19: memref<1x32xf32, #tpu.memory_space<vmem>>, %arg20: memref<1x1x32xf32, #tpu.memory_space<vmem>>, %arg21: memref<8x32xf32, #tpu.memory_space<vmem>>) attributes {dimension_semantics = [#tpu.dimension_semantics<parallel>, #tpu.dimension_semantics<arbitrary>], iteration_bounds = array<i64: 2, 2>, scalar_prefetch = 0 : i64, scratch_operands = 1 : i64, tpu.core_type = #tpu.core_type<tc>, window_params = [{transform_indices = @transform_0, window_bounds = array<i64: 1, 8, 32>}, {transform_indices = @transform_1, window_bounds = array<i64: 1, 1, 8>}, {pipeline_mode = #tpu.pipeline_mode<synchronous>, transform_indices = @transform_2, window_bounds = array<i64: 1, 32>}, {pipeline_mode = #tpu.pipeline_mode<synchronous>, transform_indices = @transform_3, window_bounds = array<i64: 1, 32>}, {transform_indices = @transform_4, window_bounds = array<i64: 1, 32, 96>}, {transform_indices = @transform_5, window_bounds = array<i64: 1, 1, 96>}, {transform_indices = @transform_6, window_bounds = array<i64: 1, 32, 32>}, {transform_indices = @transform_7, window_bounds = array<i64: 1, 1, 32>}, {transform_indices = @transform_8, window_bounds = array<i64: 1, 1, 32>}, {transform_indices = @transform_9, window_bounds = array<i64: 1, 1, 32>}, {transform_indices = @transform_10, window_bounds = array<i64: 1, 32, 64>}, {transform_indices = @transform_11, window_bounds = array<i64: 1, 1, 64>}, {transform_indices = @transform_12, window_bounds = array<i64: 1, 64, 32>}, {transform_indices = @transform_13, window_bounds = array<i64: 1, 1, 32>}, {transform_indices = @transform_14, window_bounds = array<i64: 1, 1, 32>}, {transform_indices = @transform_15, window_bounds = array<i64: 1, 1, 32>}, {pipeline_mode = #tpu.pipeline_mode<synchronous>, transform_indices = @transform_16, window_bounds = array<i64: 32, 32>}, {pipeline_mode = #tpu.pipeline_mode<synchronous>, transform_indices = @transform_17, window_bounds = array<i64: 1, 32>}, {transform_indices = @transform_18, window_bounds = array<i64: 1, 1, 32>}]} {
    %c0_i32 = arith.constant 0 : i32
    %0 = arith.cmpi eq, %arg1, %c0_i32 : i32
    %1 = arith.extui %0 : i1 to i32
    %c0_i32_0 = arith.constant 0 : i32
    %2 = arith.cmpi ne, %1, %c0_i32_0 : i32
    scf.if %2 {
      %c0_77 = arith.constant 0 : index
      %c0_78 = arith.constant 0 : index
      %c0_79 = arith.constant 0 : index
      %188 = vector.load %arg2[%c0_77, %c0_78, %c0_79] : memref<1x8x32xf32, #tpu.memory_space<vmem>>, vector<1x8x32xf32>
      %189 = vector.shape_cast %188 : vector<1x8x32xf32> to vector<8x32xf32>
      %c0_80 = arith.constant 0 : index
      %c0_81 = arith.constant 0 : index
      %190 = vector.load %arg4[%c0_80, %c0_81] : memref<1x32xf32, #tpu.memory_space<vmem>>, vector<1x32xf32>
      %c0_82 = arith.constant 0 : index
      %c0_83 = arith.constant 0 : index
      %191 = vector.load %arg5[%c0_82, %c0_83] : memref<1x32xf32, #tpu.memory_space<vmem>>, vector<1x32xf32>
      %cst_84 = arith.constant dense<0.000000e+00> : vector<8xf32>
      %192 = vector.multi_reduction <add>, %189, %cst_84 [1] : vector<8x32xf32> to vector<8xf32>
      %193 = vector.shape_cast %192 : vector<8xf32> to vector<8x1xf32>
      %cst_85 = arith.constant 3.200000e+01 : f32
      %194 = vector.broadcast %cst_85 : f32 to vector<8x1xf32>
      %195 = arith.divf %193, %194 : vector<8x1xf32>
      %196 = vector.broadcast %195 : vector<8x1xf32> to vector<8x32xf32>
      %197 = arith.subf %189, %196 : vector<8x32xf32>
      %198 = arith.mulf %197, %197 : vector<8x32xf32>
      %cst_86 = arith.constant dense<0.000000e+00> : vector<8xf32>
      %199 = vector.multi_reduction <add>, %198, %cst_86 [1] : vector<8x32xf32> to vector<8xf32>
      %200 = vector.shape_cast %199 : vector<8xf32> to vector<8x1xf32>
      %cst_87 = arith.constant 3.200000e+01 : f32
      %201 = vector.broadcast %cst_87 : f32 to vector<8x1xf32>
      %202 = arith.divf %200, %201 : vector<8x1xf32>
      %cst_88 = arith.constant 9.99999996E-13 : f32
      %203 = vector.broadcast %cst_88 : f32 to vector<8x1xf32>
      %204 = arith.addf %202, %203 : vector<8x1xf32>
      %205 = math.rsqrt %204 : vector<8x1xf32>
      %206 = vector.broadcast %205 : vector<8x1xf32> to vector<8x32xf32>
      %207 = arith.mulf %197, %206 : vector<8x32xf32>
      %208 = vector.broadcast %190 : vector<1x32xf32> to vector<8x32xf32>
      %209 = arith.mulf %207, %208 : vector<8x32xf32>
      %210 = vector.broadcast %191 : vector<1x32xf32> to vector<8x32xf32>
      %211 = arith.addf %209, %210 : vector<8x32xf32>
      %c0_89 = arith.constant 0 : index
      %c0_90 = arith.constant 0 : index
      %212 = vector.load %arg21[%c0_89, %c0_90] : memref<8x32xf32, #tpu.memory_space<vmem>>, vector<8x32xf32>
      tpu.vector_store %arg21[%c0_89, %c0_90], %211 {strides = array<i32>} : memref<8x32xf32, #tpu.memory_space<vmem>>, vector<8x32xf32>,
    } else {
    }
    %c0 = arith.constant 0 : index
    %c0_1 = arith.constant 0 : index
    %3 = vector.load %arg21[%c0, %c0_1] : memref<8x32xf32, #tpu.memory_space<vmem>>, vector<8x32xf32>
    %c0_2 = arith.constant 0 : index
    %c0_3 = arith.constant 0 : index
    %c0_4 = arith.constant 0 : index
    %4 = vector.load %arg6[%c0_2, %c0_3, %c0_4] : memref<1x32x96xbf16, #tpu.memory_space<vmem>>, vector<1x32x96xbf16>
    %5 = vector.shape_cast %4 : vector<1x32x96xbf16> to vector<32x96xbf16>
    %6 = arith.truncf %3 : vector<8x32xf32> to vector<8x32xbf16>
    %cst = arith.constant dense<0.000000e+00> : vector<8x96xf32>
    %7 = tpu.matmul %6, %5, %cst {dimension_numbers = #tpu.dot_dimension_numbers<[1], [0], [0], [1], [0, 0, 1, 1], [], []>} : vector<8x32xbf16>, vector<32x96xbf16>, vector<8x96xf32> -> vector<8x96xf32>
    %c0_5 = arith.constant 0 : index
    %c0_6 = arith.constant 0 : index
    %c0_7 = arith.constant 0 : index
    %8 = vector.load %arg7[%c0_5, %c0_6, %c0_7] : memref<1x1x96xf32, #tpu.memory_space<vmem>>, vector<1x1x96xf32>
    %9 = vector.shape_cast %8 : vector<1x1x96xf32> to vector<1x96xf32>
    %10 = vector.broadcast %9 : vector<1x96xf32> to vector<8x96xf32>
    %11 = arith.addf %7, %10 : vector<8x96xf32>
    %c0_8 = arith.constant 0 : index
    %c0_9 = arith.constant 0 : index
    %c0_10 = arith.constant 0 : index
    %12 = vector.load %arg3[%c0_8, %c0_9, %c0_10] : memref<1x1x8xf32, #tpu.memory_space<vmem>>, vector<1x1x8xf32>
    %13 = vector.shape_cast %12 : vector<1x1x8xf32> to vector<1x8xf32>
    %14 = vector.shape_cast %13 : vector<1x8xf32> to vector<1x8xf32>
    %15 = vector.broadcast %14 : vector<1x8xf32> to vector<8x8xf32>
    %16 = vector.extract_strided_slice %11 {offsets = [0, 0], sizes = [8, 8], strides = [1, 1]} : vector<8x96xf32> to vector<8x8xf32>
    %17 = vector.extract_strided_slice %11 {offsets = [0, 32], sizes = [8, 8], strides = [1, 1]} : vector<8x96xf32> to vector<8x8xf32>
    %18 = vector.extract_strided_slice %11 {offsets = [0, 64], sizes = [8, 8], strides = [1, 1]} : vector<8x96xf32> to vector<8x8xf32>
    %19 = arith.truncf %16 : vector<8x8xf32> to vector<8x8xbf16>
    %20 = arith.truncf %17 : vector<8x8xf32> to vector<8x8xbf16>
    %cst_11 = arith.constant dense<0.000000e+00> : vector<8x8xf32>
    %21 = tpu.matmul %19, %20, %cst_11 {dimension_numbers = #tpu.dot_dimension_numbers<[1], [1], [0], [0], [0, 0, 1, 0], [], []>} : vector<8x8xbf16>, vector<8x8xbf16>, vector<8x8xf32> -> vector<8x8xf32>
    %22 = arith.addf %21, %15 : vector<8x8xf32>
    %cst_12 = arith.constant dense<0xFF800000> : vector<8xf32>
    %23 = vector.multi_reduction <maximumf>, %22, %cst_12 [1] : vector<8x8xf32> to vector<8xf32>
    %24 = vector.shape_cast %23 : vector<8xf32> to vector<8x1xf32>
    %25 = vector.broadcast %24 : vector<8x1xf32> to vector<8x8xf32>
    %26 = arith.subf %22, %25 : vector<8x8xf32>
    %27 = math.exp %26 : vector<8x8xf32>
    %cst_13 = arith.constant dense<0.000000e+00> : vector<8xf32>
    %28 = vector.multi_reduction <add>, %27, %cst_13 [1] : vector<8x8xf32> to vector<8xf32>
    %29 = vector.shape_cast %28 : vector<8xf32> to vector<8x1xf32>
    %30 = tpu.reciprocal %29 {approx = true} : vector<8x1xf32> -> vector<8x1xf32>
    %31 = vector.broadcast %30 : vector<8x1xf32> to vector<8x8xf32>
    %32 = arith.mulf %27, %31 : vector<8x8xf32>
    %33 = arith.truncf %32 : vector<8x8xf32> to vector<8x8xbf16>
    %34 = arith.truncf %18 : vector<8x8xf32> to vector<8x8xbf16>
    %cst_14 = arith.constant dense<0.000000e+00> : vector<8x8xf32>
    %35 = tpu.matmul %33, %34, %cst_14 {dimension_numbers = #tpu.dot_dimension_numbers<[1], [0], [0], [1], [0, 0, 1, 1], [], []>} : vector<8x8xbf16>, vector<8x8xbf16>, vector<8x8xf32> -> vector<8x8xf32>
    %36 = vector.extract_strided_slice %11 {offsets = [0, 8], sizes = [8, 8], strides = [1, 1]} : vector<8x96xf32> to vector<8x8xf32>
    %37 = vector.extract_strided_slice %11 {offsets = [0, 40], sizes = [8, 8], strides = [1, 1]} : vector<8x96xf32> to vector<8x8xf32>
    %38 = vector.extract_strided_slice %11 {offsets = [0, 72], sizes = [8, 8], strides = [1, 1]} : vector<8x96xf32> to vector<8x8xf32>
    %39 = arith.truncf %36 : vector<8x8xf32> to vector<8x8xbf16>
    %40 = arith.truncf %37 : vector<8x8xf32> to vector<8x8xbf16>
    %cst_15 = arith.constant dense<0.000000e+00> : vector<8x8xf32>
    %41 = tpu.matmul %39, %40, %cst_15 {dimension_numbers = #tpu.dot_dimension_numbers<[1], [1], [0], [0], [0, 0, 1, 0], [], []>} : vector<8x8xbf16>, vector<8x8xbf16>, vector<8x8xf32> -> vector<8x8xf32>
    %42 = arith.addf %41, %15 : vector<8x8xf32>
    %cst_16 = arith.constant dense<0xFF800000> : vector<8xf32>
    %43 = vector.multi_reduction <maximumf>, %42, %cst_16 [1] : vector<8x8xf32> to vector<8xf32>
    %44 = vector.shape_cast %43 : vector<8xf32> to vector<8x1xf32>
    %45 = vector.broadcast %44 : vector<8x1xf32> to vector<8x8xf32>
    %46 = arith.subf %42, %45 : vector<8x8xf32>
    %47 = math.exp %46 : vector<8x8xf32>
    %cst_17 = arith.constant dense<0.000000e+00> : vector<8xf32>
    %48 = vector.multi_reduction <add>, %47, %cst_17 [1] : vector<8x8xf32> to vector<8xf32>
    %49 = vector.shape_cast %48 : vector<8xf32> to vector<8x1xf32>
    %50 = tpu.reciprocal %49 {approx = true} : vector<8x1xf32> -> vector<8x1xf32>
    %51 = vector.broadcast %50 : vector<8x1xf32> to vector<8x8xf32>
    %52 = arith.mulf %47, %51 : vector<8x8xf32>
    %53 = arith.truncf %52 : vector<8x8xf32> to vector<8x8xbf16>
    %54 = arith.truncf %38 : vector<8x8xf32> to vector<8x8xbf16>
    %cst_18 = arith.constant dense<0.000000e+00> : vector<8x8xf32>
    %55 = tpu.matmul %53, %54, %cst_18 {dimension_numbers = #tpu.dot_dimension_numbers<[1], [0], [0], [1], [0, 0, 1, 1], [], []>} : vector<8x8xbf16>, vector<8x8xbf16>, vector<8x8xf32> -> vector<8x8xf32>
    %56 = vector.extract_strided_slice %11 {offsets = [0, 16], sizes = [8, 8], strides = [1, 1]} : vector<8x96xf32> to vector<8x8xf32>
    %57 = vector.extract_strided_slice %11 {offsets = [0, 48], sizes = [8, 8], strides = [1, 1]} : vector<8x96xf32> to vector<8x8xf32>
    %58 = vector.extract_strided_slice %11 {offsets = [0, 80], sizes = [8, 8], strides = [1, 1]} : vector<8x96xf32> to vector<8x8xf32>
    %59 = arith.truncf %56 : vector<8x8xf32> to vector<8x8xbf16>
    %60 = arith.truncf %57 : vector<8x8xf32> to vector<8x8xbf16>
    %cst_19 = arith.constant dense<0.000000e+00> : vector<8x8xf32>
    %61 = tpu.matmul %59, %60, %cst_19 {dimension_numbers = #tpu.dot_dimension_numbers<[1], [1], [0], [0], [0, 0, 1, 0], [], []>} : vector<8x8xbf16>, vector<8x8xbf16>, vector<8x8xf32> -> vector<8x8xf32>
    %62 = arith.addf %61, %15 : vector<8x8xf32>
    %cst_20 = arith.constant dense<0xFF800000> : vector<8xf32>
    %63 = vector.multi_reduction <maximumf>, %62, %cst_20 [1] : vector<8x8xf32> to vector<8xf32>
    %64 = vector.shape_cast %63 : vector<8xf32> to vector<8x1xf32>
    %65 = vector.broadcast %64 : vector<8x1xf32> to vector<8x8xf32>
    %66 = arith.subf %62, %65 : vector<8x8xf32>
    %67 = math.exp %66 : vector<8x8xf32>
    %cst_21 = arith.constant dense<0.000000e+00> : vector<8xf32>
    %68 = vector.multi_reduction <add>, %67, %cst_21 [1] : vector<8x8xf32> to vector<8xf32>
    %69 = vector.shape_cast %68 : vector<8xf32> to vector<8x1xf32>
    %70 = tpu.reciprocal %69 {approx = true} : vector<8x1xf32> -> vector<8x1xf32>
    %71 = vector.broadcast %70 : vector<8x1xf32> to vector<8x8xf32>
    %72 = arith.mulf %67, %71 : vector<8x8xf32>
    %73 = arith.truncf %72 : vector<8x8xf32> to vector<8x8xbf16>
    %74 = arith.truncf %58 : vector<8x8xf32> to vector<8x8xbf16>
    %cst_22 = arith.constant dense<0.000000e+00> : vector<8x8xf32>
    %75 = tpu.matmul %73, %74, %cst_22 {dimension_numbers = #tpu.dot_dimension_numbers<[1], [0], [0], [1], [0, 0, 1, 1], [], []>} : vector<8x8xbf16>, vector<8x8xbf16>, vector<8x8xf32> -> vector<8x8xf32>
    %76 = vector.extract_strided_slice %11 {offsets = [0, 24], sizes = [8, 8], strides = [1, 1]} : vector<8x96xf32> to vector<8x8xf32>
    %77 = vector.extract_strided_slice %11 {offsets = [0, 56], sizes = [8, 8], strides = [1, 1]} : vector<8x96xf32> to vector<8x8xf32>
    %78 = vector.extract_strided_slice %11 {offsets = [0, 88], sizes = [8, 8], strides = [1, 1]} : vector<8x96xf32> to vector<8x8xf32>
    %79 = arith.truncf %76 : vector<8x8xf32> to vector<8x8xbf16>
    %80 = arith.truncf %77 : vector<8x8xf32> to vector<8x8xbf16>
    %cst_23 = arith.constant dense<0.000000e+00> : vector<8x8xf32>
    %81 = tpu.matmul %79, %80, %cst_23 {dimension_numbers = #tpu.dot_dimension_numbers<[1], [1], [0], [0], [0, 0, 1, 0], [], []>} : vector<8x8xbf16>, vector<8x8xbf16>, vector<8x8xf32> -> vector<8x8xf32>
    %82 = arith.addf %81, %15 : vector<8x8xf32>
    %cst_24 = arith.constant dense<0xFF800000> : vector<8xf32>
    %83 = vector.multi_reduction <maximumf>, %82, %cst_24 [1] : vector<8x8xf32> to vector<8xf32>
    %84 = vector.shape_cast %83 : vector<8xf32> to vector<8x1xf32>
    %85 = vector.broadcast %84 : vector<8x1xf32> to vector<8x8xf32>
    %86 = arith.subf %82, %85 : vector<8x8xf32>
    %87 = math.exp %86 : vector<8x8xf32>
    %cst_25 = arith.constant dense<0.000000e+00> : vector<8xf32>
    %88 = vector.multi_reduction <add>, %87, %cst_25 [1] : vector<8x8xf32> to vector<8xf32>
    %89 = vector.shape_cast %88 : vector<8xf32> to vector<8x1xf32>
    %90 = tpu.reciprocal %89 {approx = true} : vector<8x1xf32> -> vector<8x1xf32>
    %91 = vector.broadcast %90 : vector<8x1xf32> to vector<8x8xf32>
    %92 = arith.mulf %87, %91 : vector<8x8xf32>
    %93 = arith.truncf %92 : vector<8x8xf32> to vector<8x8xbf16>
    %94 = arith.truncf %78 : vector<8x8xf32> to vector<8x8xbf16>
    %cst_26 = arith.constant dense<0.000000e+00> : vector<8x8xf32>
    %95 = tpu.matmul %93, %94, %cst_26 {dimension_numbers = #tpu.dot_dimension_numbers<[1], [0], [0], [1], [0, 0, 1, 1], [], []>} : vector<8x8xbf16>, vector<8x8xbf16>, vector<8x8xf32> -> vector<8x8xf32>
    %96 = tpu.concatenate %35, %55, %75, %95 in 1 : vector<8x8xf32>, vector<8x8xf32>, vector<8x8xf32>, vector<8x8xf32> -> vector<8x32xf32>
    %c0_27 = arith.constant 0 : index
    %c0_28 = arith.constant 0 : index
    %c0_29 = arith.constant 0 : index
    %97 = vector.load %arg8[%c0_27, %c0_28, %c0_29] : memref<1x32x32xbf16, #tpu.memory_space<vmem>>, vector<1x32x32xbf16>
    %98 = vector.shape_cast %97 : vector<1x32x32xbf16> to vector<32x32xbf16>
    %99 = arith.truncf %96 : vector<8x32xf32> to vector<8x32xbf16>
    %cst_30 = arith.constant dense<0.000000e+00> : vector<8x32xf32>
    %100 = tpu.matmul %99, %98, %cst_30 {dimension_numbers = #tpu.dot_dimension_numbers<[1], [0], [0], [1], [0, 0, 1, 1], [], []>} : vector<8x32xbf16>, vector<32x32xbf16>, vector<8x32xf32> -> vector<8x32xf32>
    %c0_31 = arith.constant 0 : index
    %c0_32 = arith.constant 0 : index
    %c0_33 = arith.constant 0 : index
    %101 = vector.load %arg9[%c0_31, %c0_32, %c0_33] : memref<1x1x32xf32, #tpu.memory_space<vmem>>, vector<1x1x32xf32>
    %102 = vector.shape_cast %101 : vector<1x1x32xf32> to vector<1x32xf32>
    %103 = vector.broadcast %102 : vector<1x32xf32> to vector<8x32xf32>
    %104 = arith.addf %100, %103 : vector<8x32xf32>
    %105 = arith.addf %3, %104 : vector<8x32xf32>
    %c0_34 = arith.constant 0 : index
    %c0_35 = arith.constant 0 : index
    %c0_36 = arith.constant 0 : index
    %106 = vector.load %arg10[%c0_34, %c0_35, %c0_36] : memref<1x1x32xf32, #tpu.memory_space<vmem>>, vector<1x1x32xf32>
    %107 = vector.shape_cast %106 : vector<1x1x32xf32> to vector<1x32xf32>
    %c0_37 = arith.constant 0 : index
    %c0_38 = arith.constant 0 : index
    %c0_39 = arith.constant 0 : index
    %108 = vector.load %arg11[%c0_37, %c0_38, %c0_39] : memref<1x1x32xf32, #tpu.memory_space<vmem>>, vector<1x1x32xf32>
    %109 = vector.shape_cast %108 : vector<1x1x32xf32> to vector<1x32xf32>
    %cst_40 = arith.constant dense<0.000000e+00> : vector<8xf32>
    %110 = vector.multi_reduction <add>, %105, %cst_40 [1] : vector<8x32xf32> to vector<8xf32>
    %111 = vector.shape_cast %110 : vector<8xf32> to vector<8x1xf32>
    %cst_41 = arith.constant 3.200000e+01 : f32
    %112 = vector.broadcast %cst_41 : f32 to vector<8x1xf32>
    %113 = arith.divf %111, %112 : vector<8x1xf32>
    %114 = vector.broadcast %113 : vector<8x1xf32> to vector<8x32xf32>
    %115 = arith.subf %105, %114 : vector<8x32xf32>
    %116 = arith.mulf %115, %115 : vector<8x32xf32>
    %cst_42 = arith.constant dense<0.000000e+00> : vector<8xf32>
    %117 = vector.multi_reduction <add>, %116, %cst_42 [1] : vector<8x32xf32> to vector<8xf32>
    %118 = vector.shape_cast %117 : vector<8xf32> to vector<8x1xf32>
    %cst_43 = arith.constant 3.200000e+01 : f32
    %119 = vector.broadcast %cst_43 : f32 to vector<8x1xf32>
    %120 = arith.divf %118, %119 : vector<8x1xf32>
    %cst_44 = arith.constant 9.99999996E-13 : f32
    %121 = vector.broadcast %cst_44 : f32 to vector<8x1xf32>
    %122 = arith.addf %120, %121 : vector<8x1xf32>
    %123 = math.rsqrt %122 : vector<8x1xf32>
    %124 = vector.broadcast %123 : vector<8x1xf32> to vector<8x32xf32>
    %125 = arith.mulf %115, %124 : vector<8x32xf32>
    %126 = vector.broadcast %107 : vector<1x32xf32> to vector<8x32xf32>
    %127 = arith.mulf %125, %126 : vector<8x32xf32>
    %128 = vector.broadcast %109 : vector<1x32xf32> to vector<8x32xf32>
    %129 = arith.addf %127, %128 : vector<8x32xf32>
    %c0_45 = arith.constant 0 : index
    %c0_46 = arith.constant 0 : index
    %c0_47 = arith.constant 0 : index
    %130 = vector.load %arg12[%c0_45, %c0_46, %c0_47] : memref<1x32x64xbf16, #tpu.memory_space<vmem>>, vector<1x32x64xbf16>
    %131 = vector.shape_cast %130 : vector<1x32x64xbf16> to vector<32x64xbf16>
    %132 = arith.truncf %129 : vector<8x32xf32> to vector<8x32xbf16>
    %cst_48 = arith.constant dense<0.000000e+00> : vector<8x64xf32>
    %133 = tpu.matmul %132, %131, %cst_48 {dimension_numbers = #tpu.dot_dimension_numbers<[1], [0], [0], [1], [0, 0, 1, 1], [], []>} : vector<8x32xbf16>, vector<32x64xbf16>, vector<8x64xf32> -> vector<8x64xf32>
    %c0_49 = arith.constant 0 : index
    %c0_50 = arith.constant 0 : index
    %c0_51 = arith.constant 0 : index
    %134 = vector.load %arg13[%c0_49, %c0_50, %c0_51] : memref<1x1x64xf32, #tpu.memory_space<vmem>>, vector<1x1x64xf32>
    %135 = vector.shape_cast %134 : vector<1x1x64xf32> to vector<1x64xf32>
    %136 = vector.broadcast %135 : vector<1x64xf32> to vector<8x64xf32>
    %137 = arith.addf %133, %136 : vector<8x64xf32>
    %cst_52 = arith.constant 5.000000e-01 : f32
    %138 = vector.broadcast %cst_52 : f32 to vector<8x64xf32>
    %139 = arith.mulf %138, %137 : vector<8x64xf32>
    %cst_53 = arith.constant 4.471500e-02 : f32
    %140 = vector.broadcast %cst_53 : f32 to vector<8x64xf32>
    %141 = arith.mulf %140, %137 : vector<8x64xf32>
    %142 = arith.mulf %141, %137 : vector<8x64xf32>
    %143 = arith.mulf %142, %137 : vector<8x64xf32>
    %144 = arith.addf %137, %143 : vector<8x64xf32>
    %cst_54 = arith.constant 0.797884583 : f32
    %145 = vector.broadcast %cst_54 : f32 to vector<8x64xf32>
    %146 = arith.mulf %145, %144 : vector<8x64xf32>
    %147 = math.tanh %146 : vector<8x64xf32>
    %cst_55 = arith.constant 1.000000e+00 : f32
    %148 = vector.broadcast %cst_55 : f32 to vector<8x64xf32>
    %149 = arith.addf %148, %147 : vector<8x64xf32>
    %150 = arith.mulf %139, %149 : vector<8x64xf32>
    %c0_56 = arith.constant 0 : index
    %c0_57 = arith.constant 0 : index
    %c0_58 = arith.constant 0 : index
    %151 = vector.load %arg14[%c0_56, %c0_57, %c0_58] : memref<1x64x32xbf16, #tpu.memory_space<vmem>>, vector<1x64x32xbf16>
    %152 = vector.shape_cast %151 : vector<1x64x32xbf16> to vector<64x32xbf16>
    %153 = arith.truncf %150 : vector<8x64xf32> to vector<8x64xbf16>
    %cst_59 = arith.constant dense<0.000000e+00> : vector<8x32xf32>
    %154 = tpu.matmul %153, %152, %cst_59 {dimension_numbers = #tpu.dot_dimension_numbers<[1], [0], [0], [1], [0, 0, 1, 1], [], []>} : vector<8x64xbf16>, vector<64x32xbf16>, vector<8x32xf32> -> vector<8x32xf32>
    %c0_60 = arith.constant 0 : index
    %c0_61 = arith.constant 0 : index
    %c0_62 = arith.constant 0 : index
    %155 = vector.load %arg15[%c0_60, %c0_61, %c0_62] : memref<1x1x32xf32, #tpu.memory_space<vmem>>, vector<1x1x32xf32>
    %156 = vector.shape_cast %155 : vector<1x1x32xf32> to vector<1x32xf32>
    %157 = vector.broadcast %156 : vector<1x32xf32> to vector<8x32xf32>
    %158 = arith.addf %154, %157 : vector<8x32xf32>
    %159 = arith.addf %129, %158 : vector<8x32xf32>
    %c0_63 = arith.constant 0 : index
    %c0_64 = arith.constant 0 : index
    %c0_65 = arith.constant 0 : index
    %160 = vector.load %arg16[%c0_63, %c0_64, %c0_65] : memref<1x1x32xf32, #tpu.memory_space<vmem>>, vector<1x1x32xf32>
    %161 = vector.shape_cast %160 : vector<1x1x32xf32> to vector<1x32xf32>
    %c0_66 = arith.constant 0 : index
    %c0_67 = arith.constant 0 : index
    %c0_68 = arith.constant 0 : index
    %162 = vector.load %arg17[%c0_66, %c0_67, %c0_68] : memref<1x1x32xf32, #tpu.memory_space<vmem>>, vector<1x1x32xf32>
    %163 = vector.shape_cast %162 : vector<1x1x32xf32> to vector<1x32xf32>
    %cst_69 = arith.constant dense<0.000000e+00> : vector<8xf32>
    %164 = vector.multi_reduction <add>, %159, %cst_69 [1] : vector<8x32xf32> to vector<8xf32>
    %165 = vector.shape_cast %164 : vector<8xf32> to vector<8x1xf32>
    %cst_70 = arith.constant 3.200000e+01 : f32
    %166 = vector.broadcast %cst_70 : f32 to vector<8x1xf32>
    %167 = arith.divf %165, %166 : vector<8x1xf32>
    %168 = vector.broadcast %167 : vector<8x1xf32> to vector<8x32xf32>
    %169 = arith.subf %159, %168 : vector<8x32xf32>
    %170 = arith.mulf %169, %169 : vector<8x32xf32>
    %cst_71 = arith.constant dense<0.000000e+00> : vector<8xf32>
    %171 = vector.multi_reduction <add>, %170, %cst_71 [1] : vector<8x32xf32> to vector<8xf32>
    %172 = vector.shape_cast %171 : vector<8xf32> to vector<8x1xf32>
    %cst_72 = arith.constant 3.200000e+01 : f32
    %173 = vector.broadcast %cst_72 : f32 to vector<8x1xf32>
    %174 = arith.divf %172, %173 : vector<8x1xf32>
    %cst_73 = arith.constant 9.99999996E-13 : f32
    %175 = vector.broadcast %cst_73 : f32 to vector<8x1xf32>
    %176 = arith.addf %174, %175 : vector<8x1xf32>
    %177 = math.rsqrt %176 : vector<8x1xf32>
    %178 = vector.broadcast %177 : vector<8x1xf32> to vector<8x32xf32>
    %179 = arith.mulf %169, %178 : vector<8x32xf32>
    %180 = vector.broadcast %161 : vector<1x32xf32> to vector<8x32xf32>
    %181 = arith.mulf %179, %180 : vector<8x32xf32>
    %182 = vector.broadcast %163 : vector<1x32xf32> to vector<8x32xf32>
    %183 = arith.addf %181, %182 : vector<8x32xf32>
    %c0_74 = arith.constant 0 : index
    %c0_75 = arith.constant 0 : index
    %184 = vector.load %arg21[%c0_74, %c0_75] : memref<8x32xf32, #tpu.memory_space<vmem>>, vector<8x32xf32>
    tpu.vector_store %arg21[%c0_74, %c0_75], %183 {strides = array<i32>} : memref<8x32xf32, #tpu.memory_space<vmem>>, vector<8x32xf32>,
    %c1_i32 = arith.constant 1 : i32
    %185 = arith.cmpi eq, %arg1, %c1_i32 : i32
    %186 = arith.extui %185 : i1 to i32
    %c0_i32_76 = arith.constant 0 : i32
    %187 = arith.cmpi ne, %186, %c0_i32_76 : i32
    scf.if %187 {
      %188 = vector.extract_strided_slice %183 {offsets = [0, 0], sizes = [1, 32], strides = [1, 1]} : vector<8x32xf32> to vector<1x32xf32>
      %c0_77 = arith.constant 0 : index
      %c0_78 = arith.constant 0 : index
      %189 = vector.load %arg18[%c0_77, %c0_78] : memref<32x32xbf16, #tpu.memory_space<vmem>>, vector<32x32xbf16>
      %190 = arith.truncf %188 : vector<1x32xf32> to vector<1x32xbf16>
      %cst_79 = arith.constant dense<0.000000e+00> : vector<1x32xf32>
      %191 = tpu.matmul %190, %189, %cst_79 {dimension_numbers = #tpu.dot_dimension_numbers<[1], [0], [0], [1], [0, 0, 1, 1], [], []>} : vector<1x32xbf16>, vector<32x32xbf16>, vector<1x32xf32> -> vector<1x32xf32>
      %c0_80 = arith.constant 0 : index
      %c0_81 = arith.constant 0 : index
      %192 = vector.load %arg19[%c0_80, %c0_81] : memref<1x32xf32, #tpu.memory_space<vmem>>, vector<1x32xf32>
      %193 = arith.addf %191, %192 : vector<1x32xf32>
      %194 = math.tanh %193 : vector<1x32xf32>
      %c0_82 = arith.constant 0 : index
      %c0_83 = arith.constant 0 : index
      %c0_84 = arith.constant 0 : index
      %195 = vector.load %arg20[%c0_82, %c0_83, %c0_84] : memref<1x1x32xf32, #tpu.memory_space<vmem>>, vector<1x1x32xf32>
      %196 = vector.shape_cast %195 : vector<1x1x32xf32> to vector<1x32xf32>
      %197 = vector.shape_cast %194 : vector<1x32xf32> to vector<1x1x32xf32>
      tpu.vector_store %arg20[%c0_82, %c0_83, %c0_84], %197 {strides = array<i32>} : memref<1x1x32xf32, #tpu.memory_space<vmem>>, vector<1x1x32xf32>,
    } else {
    }
    return
  }
  func.func @transform_0(%arg0: i32, %arg1: i32) -> (i32, i32, i32) {
    %c0_i32 = arith.constant 0 : i32
    %c0_i32_0 = arith.constant 0 : i32
    %c0_i32_1 = arith.constant 0 : i32
    return %arg0, %c0_i32, %c0_i32_0 : i32, i32, i32
  }
  func.func @transform_1(%arg0: i32, %arg1: i32) -> (i32, i32, i32) {
    %c0_i32 = arith.constant 0 : i32
    %c0_i32_0 = arith.constant 0 : i32
    %c0_i32_1 = arith.constant 0 : i32
    return %arg0, %c0_i32, %c0_i32_0 : i32, i32, i32
  }
  func.func @transform_2(%arg0: i32, %arg1: i32) -> (i32, i32) {
    %c0_i32 = arith.constant 0 : i32
    %c0_i32_0 = arith.constant 0 : i32
    %c0_i32_1 = arith.constant 0 : i32
    return %c0_i32, %c0_i32_0 : i32, i32
  }
  func.func @transform_3(%arg0: i32, %arg1: i32) -> (i32, i32) {
    %c0_i32 = arith.constant 0 : i32
    %c0_i32_0 = arith.constant 0 : i32
    %c0_i32_1 = arith.constant 0 : i32
    return %c0_i32, %c0_i32_0 : i32, i32
  }
  func.func @transform_4(%arg0: i32, %arg1: i32) -> (i32, i32, i32) {
    %c0_i32 = arith.constant 0 : i32
    %c0_i32_0 = arith.constant 0 : i32
    %c0_i32_1 = arith.constant 0 : i32
    return %arg1, %c0_i32, %c0_i32_0 : i32, i32, i32
  }
  func.func @transform_5(%arg0: i32, %arg1: i32) -> (i32, i32, i32) {
    %c0_i32 = arith.constant 0 : i32
    %c0_i32_0 = arith.constant 0 : i32
    %c0_i32_1 = arith.constant 0 : i32
    return %arg1, %c0_i32, %c0_i32_0 : i32, i32, i32
  }
  func.func @transform_6(%arg0: i32, %arg1: i32) -> (i32, i32, i32) {
    %c0_i32 = arith.constant 0 : i32
    %c0_i32_0 = arith.constant 0 : i32
    %c0_i32_1 = arith.constant 0 : i32
    return %arg1, %c0_i32, %c0_i32_0 : i32, i32, i32
  }
  func.func @transform_7(%arg0: i32, %arg1: i32) -> (i32, i32, i32) {
    %c0_i32 = arith.constant 0 : i32
    %c0_i32_0 = arith.constant 0 : i32
    %c0_i32_1 = arith.constant 0 : i32
    return %arg1, %c0_i32, %c0_i32_0 : i32, i32, i32
  }
  func.func @transform_8(%arg0: i32, %arg1: i32) -> (i32, i32, i32) {
    %c0_i32 = arith.constant 0 : i32
    %c0_i32_0 = arith.constant 0 : i32
    %c0_i32_1 = arith.constant 0 : i32
    return %arg1, %c0_i32, %c0_i32_0 : i32, i32, i32
  }
  func.func @transform_9(%arg0: i32, %arg1: i32) -> (i32, i32, i32) {
    %c0_i32 = arith.constant 0 : i32
    %c0_i32_0 = arith.constant 0 : i32
    %c0_i32_1 = arith.constant 0 : i32
    return %arg1, %c0_i32, %c0_i32_0 : i32, i32, i32
  }
  func.func @transform_10(%arg0: i32, %arg1: i32) -> (i32, i32, i32) {
    %c0_i32 = arith.constant 0 : i32
    %c0_i32_0 = arith.constant 0 : i32
    %c0_i32_1 = arith.constant 0 : i32
    return %arg1, %c0_i32, %c0_i32_0 : i32, i32, i32
  }
  func.func @transform_11(%arg0: i32, %arg1: i32) -> (i32, i32, i32) {
    %c0_i32 = arith.constant 0 : i32
    %c0_i32_0 = arith.constant 0 : i32
    %c0_i32_1 = arith.constant 0 : i32
    return %arg1, %c0_i32, %c0_i32_0 : i32, i32, i32
  }
  func.func @transform_12(%arg0: i32, %arg1: i32) -> (i32, i32, i32) {
    %c0_i32 = arith.constant 0 : i32
    %c0_i32_0 = arith.constant 0 : i32
    %c0_i32_1 = arith.constant 0 : i32
    return %arg1, %c0_i32, %c0_i32_0 : i32, i32, i32
  }
  func.func @transform_13(%arg0: i32, %arg1: i32) -> (i32, i32, i32) {
    %c0_i32 = arith.constant 0 : i32
    %c0_i32_0 = arith.constant 0 : i32
    %c0_i32_1 = arith.constant 0 : i32
    return %arg1, %c0_i32, %c0_i32_0 : i32, i32, i32
  }
  func.func @transform_14(%arg0: i32, %arg1: i32) -> (i32, i32, i32) {
    %c0_i32 = arith.constant 0 : i32
    %c0_i32_0 = arith.constant 0 : i32
    %c0_i32_1 = arith.constant 0 : i32
    return %arg1, %c0_i32, %c0_i32_0 : i32, i32, i32
  }
  func.func @transform_15(%arg0: i32, %arg1: i32) -> (i32, i32, i32) {
    %c0_i32 = arith.constant 0 : i32
    %c0_i32_0 = arith.constant 0 : i32
    %c0_i32_1 = arith.constant 0 : i32
    return %arg1, %c0_i32, %c0_i32_0 : i32, i32, i32
  }
  func.func @transform_16(%arg0: i32, %arg1: i32) -> (i32, i32) {
    %c0_i32 = arith.constant 0 : i32
    %c0_i32_0 = arith.constant 0 : i32
    %c0_i32_1 = arith.constant 0 : i32
    return %c0_i32, %c0_i32_0 : i32, i32
  }
  func.func @transform_17(%arg0: i32, %arg1: i32) -> (i32, i32) {
    %c0_i32 = arith.constant 0 : i32
    %c0_i32_0 = arith.constant 0 : i32
    %c0_i32_1 = arith.constant 0 : i32
    return %c0_i32, %c0_i32_0 : i32, i32
  }
  func.func @transform_18(%arg0: i32, %arg1: i32) -> (i32, i32, i32) {
    %c0_i32 = arith.constant 0 : i32
    %c0_i32_0 = arith.constant 0 : i32
    %c0_i32_1 = arith.constant 0 : i32
    return %arg0, %c0_i32, %c0_i32_0 : i32, i32, i32
  }
}

</mosaic_0001>

<llo_original>
// kernel: tpu_custom_call.1
$region0: #{tpu_custom_call.1}
  #allocation0 [shape = 'u32[]', space=smem, size = 0x4, offset = 0x4, fixed_abs, tag = 'smem constant byte address 0x4 - core index']
  #allocation1 [shape = 'u32[144,128]{1,0:T(1,128)}', space=vmem, size = 0x12000, scoped, tag = 'internal scratch']
  #allocation2 [shape = 'f32[8,32]{1,0:T(8,128)}', space=vmem, size = 0x1000, scoped, tag = 'scratch operand']
  %s0 = inlined_call_operand.hbm [shape: f32[2,8,32], index: 0, kind: input, shape index: {}]
  %s1 = inlined_call_operand.hbm [shape: f32[2,1,8], index: 1, kind: input, shape index: {}]
  %s2 = inlined_call_operand.vmem [shape: f32[1,32], index: 2, kind: input, shape index: {}]
  %s3 = inlined_call_operand.hbm [shape: f32[1,32], index: 3, kind: input, shape index: {}]
  %s4 = inlined_call_operand.vmem [shape: bf16[2,32,96], index: 4, kind: input, shape index: {}]
  %s5 = inlined_call_operand.hbm [shape: f32[2,1,96], index: 5, kind: input, shape index: {}]
  %s6 = inlined_call_operand.vmem [shape: bf16[2,32,32], index: 6, kind: input, shape index: {}]
  %s7 = inlined_call_operand.hbm [shape: f32[2,1,32], index: 7, kind: input, shape index: {}]
  %s8 = inlined_call_operand.hbm [shape: f32[2,1,32], index: 8, kind: input, shape index: {}]
  %s9 = inlined_call_operand.hbm [shape: f32[2,1,32], index: 9, kind: input, shape index: {}]
  %s10 = inlined_call_operand.vmem [shape: bf16[2,32,64], index: 10, kind: input, shape index: {}]
  %s11 = inlined_call_operand.hbm [shape: f32[2,1,64], index: 11, kind: input, shape index: {}]
  %s12 = inlined_call_operand.vmem [shape: bf16[2,64,32], index: 12, kind: input, shape index: {}]
  %s13 = inlined_call_operand.hbm [shape: f32[2,1,32], index: 13, kind: input, shape index: {}]
  %s14 = inlined_call_operand.vmem [shape: f32[2,1,32], index: 14, kind: input, shape index: {}]
  %s15 = inlined_call_operand.vmem [shape: f32[2,1,32], index: 15, kind: input, shape index: {}]
  %s16 = inlined_call_operand.vmem [shape: bf16[32,32], index: 16, kind: input, shape index: {}]
  %s17 = inlined_call_operand.vmem [shape: f32[1,32], index: 17, kind: input, shape index: {}]
  %s18 = inlined_call_operand.hbm [shape: f32[2,1,32], index: 18, kind: output, shape index: {}]
  %s19 = sld [smem:[#allocation0]]
  $region149: #{tpu_custom_call.1} parent=0
    _
  %s21 = ssub.s32 1, %s19
  %s22 = scalar_select 0, %s21, %s19
  $region1: #{tpu_custom_call.1} parent=0
    #allocation3 [shape = 'u8[8192]{0}', space=vmem, size = 0x2000, scoped, tag = 'input window, operand 0']
    #allocation4 [shape = 's32[2]{0}', space=sflag, size = 0x8, scoped, tag = 'scoped memory for tpu_custom_call.1']
    #allocation5 [shape = 's32[2]{0}', space=sflag, size = 0x8, scoped, tag = 'scoped memory for tpu_custom_call.1']
    #allocation6 [shape = 'u8[1024]{0}', space=vmem, size = 0x400, scoped, tag = 'input window, operand 1']
    #allocation7 [shape = 's32[2]{0}', space=sflag, size = 0x8, scoped, tag = 'scoped memory for tpu_custom_call.1']
    #allocation8 [shape = 'u8[512]{0}', space=vmem, size = 0x400, scoped, tag = 'input window, operand 3, single buffered']
    #allocation9 [shape = 'u8[1024]{0}', space=vmem, size = 0x400, scoped, tag = 'input window, operand 5']
    #allocation10 [shape = 's32[2]{0}', space=sflag, size = 0x8, scoped, tag = 'scoped memory for tpu_custom_call.1']
    #allocation11 [shape = 'u8[1024]{0}', space=vmem, size = 0x400, scoped, tag = 'input window, operand 7']
    #allocation12 [shape = 'u8[1024]{0}', space=vmem, size = 0x400, scoped, tag = 'input window, operand 8']
    #allocation13 [shape = 's32[2]{0}', space=sflag, size = 0x8, scoped, tag = 'scoped memory for tpu_custom_call.1']
    #allocation14 [shape = 'u8[1024]{0}', space=vmem, size = 0x400, scoped, tag = 'input window, operand 9']
    #allocation15 [shape = 'u8[1024]{0}', space=vmem, size = 0x400, scoped, tag = 'input window, operand 11']
    #allocation16 [shape = 's32[2]{0}', space=sflag, size = 0x8, scoped, tag = 'scoped memory for tpu_custom_call.1']
    #allocation17 [shape = 'u8[1024]{0}', space=vmem, size = 0x400, scoped, tag = 'input window, operand 13']
    #allocation18 [shape = 'u8[1024]{0}', space=vmem, size = 0x400, scoped, tag = 'output window, operand 0']
    %23 = vsyncpa [#allocation4], 0
    %s24 = scalar_lea.sflag [#allocation4], 1
    %25 = vsyncpa %s24, 0
    %26 = vsyncpa [#allocation7], 0
    %s27 = scalar_lea.sflag [#allocation7], 1
    %28 = vsyncpa %s27, 0
    %29 = vsyncpa [#allocation10], 0
    %s30 = scalar_lea.sflag [#allocation10], 1
    %31 = vsyncpa %s30, 0
    %32 = vsyncpa [#allocation13], 0
    %s33 = scalar_lea.sflag [#allocation13], 1
    %34 = vsyncpa %s33, 0
    %35 = vsyncpa [#allocation16], 0
    %s36 = scalar_lea.sflag [#allocation16], 1
    %37 = vsyncpa %s36, 0
    %38 = vsyncpa [#allocation5], 0
    %s39 = scalar_lea.sflag [#allocation5], 1
    %40 = vsyncpa %s39, 0
    loop: start=0, step=1, limit=6
    $region2: #{tpu_custom_call.1} parent=1 // loop_pre_header
      _
    $region3: #{tpu_custom_call.1} parent=1 // loop_header
      %s42 = sphi 0, %s46
      %p43 = scmp.ge.s32.totalorder %s42, 6
      %s49 = sphi 0, %s61
      %s50 = sphi 0, %s57
      %s51 = sphi 0, %s49
      %s52 = sphi 0, %s50
      %s53 = sphi 0, %s51
      %s54 = sphi 0, %s52
      %s64 = sphi 0, %s66
      %s67 = sphi 0, %s64
      %s68 = sphi 0, %s67
      %s84 = sphi 0, %s68
      %s90 = sphi 0, %s92
      %s93 = sphi 0, %s90
      %s94 = sphi 0, %s93
      %s110 = sphi 0, %s94
      %s114 = sphi 0, %s114
      %s116 = sphi 0, %s114
      %s117 = sphi 0, %s116
      %s131 = sphi 0, %s117
      %s135 = sphi 0, %s135
      %s137 = sphi 0, %s135
      %s138 = sphi 0, %s137
      %s152 = sphi 0, %s138
      %s158 = sphi 0, %s160
      %s161 = sphi 0, %s158
      %s162 = sphi 0, %s161
      %s178 = sphi 0, %s162
      %s184 = sphi 0, %s186
      %s187 = sphi 0, %s184
      %s188 = sphi 0, %s187
      %s204 = sphi 0, %s188
      %s210 = sphi 0, %s212
      %s213 = sphi 0, %s210
      %s214 = sphi 0, %s213
      %s230 = sphi 0, %s214
      %s236 = sphi 0, %s238
      %s239 = sphi 0, %s236
      %s240 = sphi 0, %s239
      %s256 = sphi 0, %s240
      %s262 = sphi 0, %s264
      %s265 = sphi 0, %s262
      %s266 = sphi 0, %s265
      %s282 = sphi 0, %s266
      %s288 = sphi 0, %s290
      %s291 = sphi 0, %s288
      %s292 = sphi 0, %s291
      %s308 = sphi 0, %s292
      %s314 = sphi 0, %s316
      %s317 = sphi 0, %s314
      %s318 = sphi 0, %s317
      %s334 = sphi 0, %s318
      %s340 = sphi 0, %s342
      %s343 = sphi 0, %s340
      %s344 = sphi 0, %s343
      %s360 = sphi 0, %s344
      %s366 = sphi 0, %s368
      %s369 = sphi 0, %s366
      %s370 = sphi 0, %s369
      %s386 = sphi 0, %s370
      %s392 = sphi 0, %s394
      %s395 = sphi 0, %s392
      %s396 = sphi 0, %s395
      %s412 = sphi 0, %s396
      %s418 = sphi 0, %s420
      %s421 = sphi 0, %s418
      %s422 = sphi 0, %s421
      %s438 = sphi 0, %s422
      %s444 = sphi 0, %s446
      %s447 = sphi 0, %s444
      %s448 = sphi 0, %s447
      %s464 = sphi 0, %s448
      %s468 = sphi 0, %s468
      %s470 = sphi 0, %s468
      %s471 = sphi 0, %s470
      %s485 = sphi 0, %s471
      %s489 = sphi 0, %s489
      %s491 = sphi 0, %s489
      %s492 = sphi 0, %s491
      %s506 = sphi 0, %s492
      %s512 = sphi 0, %s514
      %s515 = sphi 0, %s512
      %s516 = sphi 0, %s515
      %s532 = sphi 0, %s516
    $region4: #{tpu_custom_call.1} parent=1 // loop_header_branch
      %45 = sbr.rel (%p43) target = $region8
    $region5: #{tpu_custom_call.1} parent=1 // loop_body
      %s47 = ssub.s32 %s42, 1
      %s48 = ssub.s32 %s42, 2
      %s55 = sadd.s32 1, %s50
      %p56 = scmp.ge.s32.totalorder %s55, 2
      %s57 = scalar_select %p56, 0, %s55
      %s58 = sadd.s32 1, %s49
      %s59 = scalar_select %p56, %s58, %s49
      %p60 = scmp.ge.s32.totalorder %s59, 2
      %s61 = scalar_select %p60, 0, %s59
      %s62 = ssub.s32 %s49, %s61
      %p63 = scmp.eq.s32.totalorder %s62, 0
      %s65 = sadd.s32 %s64, 1
      %s66 = scalar_select %p63, %s64, %s65
      %p69 = pneg %p63
      %p70 = scmp.eq.s32.totalorder %s42, 3
      %p71 = por %p69, %p70
      %p72 = scmp.ne.s32.totalorder %s64, %s67
      %p73 = scmp.eq.s32.totalorder %s42, 0
      %p74 = por %p72, %p73
      %p75 = scmp.ne.s32.totalorder %s64, %s67
      %p76 = scmp.eq.s32.totalorder %s47, 3
      %p77 = por %p75, %p76
      %p78 = scmp.ne.s32.totalorder %s67, %s68
      %p79 = scmp.eq.s32.totalorder %s47, 0
      %p80 = por %p78, %p79
      %p81 = scmp.ne.s32.totalorder %s67, %s68
      %p82 = scmp.eq.s32.totalorder %s48, 3
      %p83 = por %p81, %p82
      %p85 = scmp.ne.s32.totalorder %s68, %s84
      %p86 = scmp.eq.s32.totalorder %s48, 0
      %p87 = por %p85, %p86
      %s88 = ssub.s32 %s49, %s61
      %p89 = scmp.eq.s32.totalorder %s88, 0
      %s91 = sadd.s32 %s90, 1
      %s92 = scalar_select %p89, %s90, %s91
      %p95 = pneg %p89
      %p96 = scmp.eq.s32.totalorder %s42, 3
      %p97 = por %p95, %p96
      %p98 = scmp.ne.s32.totalorder %s90, %s93
      %p99 = scmp.eq.s32.totalorder %s42, 0
      %p100 = por %p98, %p99
      %p101 = scmp.ne.s32.totalorder %s90, %s93
      %p102 = scmp.eq.s32.totalorder %s47, 3
      %p103 = por %p101, %p102
      %p104 = scmp.ne.s32.totalorder %s93, %s94
      %p105 = scmp.eq.s32.totalorder %s47, 0
      %p106 = por %p104, %p105
      %p107 = scmp.ne.s32.totalorder %s93, %s94
      %p108 = scmp.eq.s32.totalorder %s48, 3
      %p109 = por %p107, %p108
      %p111 = scmp.ne.s32.totalorder %s94, %s110
      %p112 = scmp.eq.s32.totalorder %s48, 0
      %p113 = por %p111, %p112
      %s115 = sadd.s32 %s114, 1
      %p118 = scmp.eq.s32.totalorder %s42, 3
      %p119 = scmp.ne.s32.totalorder %s114, %s116
      %p120 = scmp.eq.s32.totalorder %s42, 0
      %p121 = por %p119, %p120
      %p122 = scmp.ne.s32.totalorder %s114, %s116
      %p123 = scmp.eq.s32.totalorder %s47, 3
      %p124 = por %p122, %p123
      %p125 = scmp.ne.s32.totalorder %s116, %s117
      %p126 = scmp.eq.s32.totalorder %s47, 0
      %p127 = por %p125, %p126
      %p128 = scmp.ne.s32.totalorder %s116, %s117
      %p129 = scmp.eq.s32.totalorder %s48, 3
      %p130 = por %p128, %p129
      %p132 = scmp.ne.s32.totalorder %s117, %s131
      %p133 = scmp.eq.s32.totalorder %s48, 0
      %p134 = por %p132, %p133
      %s136 = sadd.s32 %s135, 1
      %p139 = scmp.eq.s32.totalorder %s42, 3
      %p140 = scmp.ne.s32.totalorder %s135, %s137
      %p141 = scmp.eq.s32.totalorder %s42, 0
      %p142 = por %p140, %p141
      %p143 = scmp.ne.s32.totalorder %s135, %s137
      %p144 = scmp.eq.s32.totalorder %s47, 3
      %p145 = por %p143, %p144
      %p146 = scmp.ne.s32.totalorder %s137, %s138
      %p147 = scmp.eq.s32.totalorder %s47, 0
      %p148 = por %p146, %p147
      %p149 = scmp.ne.s32.totalorder %s137, %s138
      %p150 = scmp.eq.s32.totalorder %s48, 3
      %p151 = por %p149, %p150
      %p153 = scmp.ne.s32.totalorder %s138, %s152
      %p154 = scmp.eq.s32.totalorder %s48, 0
      %p155 = por %p153, %p154
      %s156 = ssub.s32 %s50, %s57
      %p157 = scmp.eq.s32.totalorder %s156, 0
      %s159 = sadd.s32 %s158, 1
      %s160 = scalar_select %p157, %s158, %s159
      %p163 = pneg %p157
      %p164 = scmp.eq.s32.totalorder %s42, 3
      %p165 = por %p163, %p164
      %p166 = scmp.ne.s32.totalorder %s158, %s161
      %p167 = scmp.eq.s32.totalorder %s42, 0
      %p168 = por %p166, %p167
      %p169 = scmp.ne.s32.totalorder %s158, %s161
      %p170 = scmp.eq.s32.totalorder %s47, 3
      %p171 = por %p169, %p170
      %p172 = scmp.ne.s32.totalorder %s161, %s162
      %p173 = scmp.eq.s32.totalorder %s47, 0
      %p174 = por %p172, %p173
      %p175 = scmp.ne.s32.totalorder %s161, %s162
      %p176 = scmp.eq.s32.totalorder %s48, 3
      %p177 = por %p175, %p176
      %p179 = scmp.ne.s32.totalorder %s162, %s178
      %p180 = scmp.eq.s32.totalorder %s48, 0
      %p181 = por %p179, %p180
      %s182 = ssub.s32 %s50, %s57
      %p183 = scmp.eq.s32.totalorder %s182, 0
      %s185 = sadd.s32 %s184, 1
      %s186 = scalar_select %p183, %s184, %s185
      %p189 = pneg %p183
      %p190 = scmp.eq.s32.totalorder %s42, 3
      %p191 = por %p189, %p190
      %p192 = scmp.ne.s32.totalorder %s184, %s187
      %p193 = scmp.eq.s32.totalorder %s42, 0
      %p194 = por %p192, %p193
      %p195 = scmp.ne.s32.totalorder %s184, %s187
      %p196 = scmp.eq.s32.totalorder %s47, 3
      %p197 = por %p195, %p196
      %p198 = scmp.ne.s32.totalorder %s187, %s188
      %p199 = scmp.eq.s32.totalorder %s47, 0
      %p200 = por %p198, %p199
      %p201 = scmp.ne.s32.totalorder %s187, %s188
      %p202 = scmp.eq.s32.totalorder %s48, 3
      %p203 = por %p201, %p202
      %p205 = scmp.ne.s32.totalorder %s188, %s204
      %p206 = scmp.eq.s32.totalorder %s48, 0
      %p207 = por %p205, %p206
      %s208 = ssub.s32 %s50, %s57
      %p209 = scmp.eq.s32.totalorder %s208, 0
      %s211 = sadd.s32 %s210, 1
      %s212 = scalar_select %p209, %s210, %s211
      %p215 = pneg %p209
      %p216 = scmp.eq.s32.totalorder %s42, 3
      %p217 = por %p215, %p216
      %p218 = scmp.ne.s32.totalorder %s210, %s213
      %p219 = scmp.eq.s32.totalorder %s42, 0
      %p220 = por %p218, %p219
      %p221 = scmp.ne.s32.totalorder %s210, %s213
      %p222 = scmp.eq.s32.totalorder %s47, 3
      %p223 = por %p221, %p222
      %p224 = scmp.ne.s32.totalorder %s213, %s214
      %p225 = scmp.eq.s32.totalorder %s47, 0
      %p226 = por %p224, %p225
      %p227 = scmp.ne.s32.totalorder %s213, %s214
      %p228 = scmp.eq.s32.totalorder %s48, 3
      %p229 = por %p227, %p228
      %p231 = scmp.ne.s32.totalorder %s214, %s230
      %p232 = scmp.eq.s32.totalorder %s48, 0
      %p233 = por %p231, %p232
      %s234 = ssub.s32 %s50, %s57
      %p235 = scmp.eq.s32.totalorder %s234, 0
      %s237 = sadd.s32 %s236, 1
      %s238 = scalar_select %p235, %s236, %s237
      %p241 = pneg %p235
      %p242 = scmp.eq.s32.totalorder %s42, 3
      %p243 = por %p241, %p242
      %p244 = scmp.ne.s32.totalorder %s236, %s239
      %p245 = scmp.eq.s32.totalorder %s42, 0
      %p246 = por %p244, %p245
      %p247 = scmp.ne.s32.totalorder %s236, %s239
      %p248 = scmp.eq.s32.totalorder %s47, 3
      %p249 = por %p247, %p248
      %p250 = scmp.ne.s32.totalorder %s239, %s240
      %p251 = scmp.eq.s32.totalorder %s47, 0
      %p252 = por %p250, %p251
      %p253 = scmp.ne.s32.totalorder %s239, %s240
      %p254 = scmp.eq.s32.totalorder %s48, 3
      %p255 = por %p253, %p254
      %p257 = scmp.ne.s32.totalorder %s240, %s256
      %p258 = scmp.eq.s32.totalorder %s48, 0
      %p259 = por %p257, %p258
      %s260 = ssub.s32 %s50, %s57
      %p261 = scmp.eq.s32.totalorder %s260, 0
      %s263 = sadd.s32 %s262, 1
      %s264 = scalar_select %p261, %s262, %s263
      %p267 = pneg %p261
      %p268 = scmp.eq.s32.totalorder %s42, 3
      %p269 = por %p267, %p268
      %p270 = scmp.ne.s32.totalorder %s262, %s265
      %p271 = scmp.eq.s32.totalorder %s42, 0
      %p272 = por %p270, %p271
      %p273 = scmp.ne.s32.totalorder %s262, %s265
      %p274 = scmp.eq.s32.totalorder %s47, 3
      %p275 = por %p273, %p274
      %p276 = scmp.ne.s32.totalorder %s265, %s266
      %p277 = scmp.eq.s32.totalorder %s47, 0
      %p278 = por %p276, %p277
      %p279 = scmp.ne.s32.totalorder %s265, %s266
      %p280 = scmp.eq.s32.totalorder %s48, 3
      %p281 = por %p279, %p280
      %p283 = scmp.ne.s32.totalorder %s266, %s282
      %p284 = scmp.eq.s32.totalorder %s48, 0
      %p285 = por %p283, %p284
      %s286 = ssub.s32 %s50, %s57
      %p287 = scmp.eq.s32.totalorder %s286, 0
      %s289 = sadd.s32 %s288, 1
      %s290 = scalar_select %p287, %s288, %s289
      %p293 = pneg %p287
      %p294 = scmp.eq.s32.totalorder %s42, 3
      %p295 = por %p293, %p294
      %p296 = scmp.ne.s32.totalorder %s288, %s291
      %p297 = scmp.eq.s32.totalorder %s42, 0
      %p298 = por %p296, %p297
      %p299 = scmp.ne.s32.totalorder %s288, %s291
      %p300 = scmp.eq.s32.totalorder %s47, 3
      %p301 = por %p299, %p300
      %p302 = scmp.ne.s32.totalorder %s291, %s292
      %p303 = scmp.eq.s32.totalorder %s47, 0
      %p304 = por %p302, %p303
      %p305 = scmp.ne.s32.totalorder %s291, %s292
      %p306 = scmp.eq.s32.totalorder %s48, 3
      %p307 = por %p305, %p306
      %p309 = scmp.ne.s32.totalorder %s292, %s308
      %p310 = scmp.eq.s32.totalorder %s48, 0
      %p311 = por %p309, %p310
      %s312 = ssub.s32 %s50, %s57
      %p313 = scmp.eq.s32.totalorder %s312, 0
      %s315 = sadd.s32 %s314, 1
      %s316 = scalar_select %p313, %s314, %s315
      %p319 = pneg %p313
      %p320 = scmp.eq.s32.totalorder %s42, 3
      %p321 = por %p319, %p320
      %p322 = scmp.ne.s32.totalorder %s314, %s317
      %p323 = scmp.eq.s32.totalorder %s42, 0
      %p324 = por %p322, %p323
      %p325 = scmp.ne.s32.totalorder %s314, %s317
      %p326 = scmp.eq.s32.totalorder %s47, 3
      %p327 = por %p325, %p326
      %p328 = scmp.ne.s32.totalorder %s317, %s318
      %p329 = scmp.eq.s32.totalorder %s47, 0
      %p330 = por %p328, %p329
      %p331 = scmp.ne.s32.totalorder %s317, %s318
      %p332 = scmp.eq.s32.totalorder %s48, 3
      %p333 = por %p331, %p332
      %p335 = scmp.ne.s32.totalorder %s318, %s334
      %p336 = scmp.eq.s32.totalorder %s48, 0
      %p337 = por %p335, %p336
      %s338 = ssub.s32 %s50, %s57
      %p339 = scmp.eq.s32.totalorder %s338, 0
      %s341 = sadd.s32 %s340, 1
      %s342 = scalar_select %p339, %s340, %s341
      %p345 = pneg %p339
      %p346 = scmp.eq.s32.totalorder %s42, 3
      %p347 = por %p345, %p346
      %p348 = scmp.ne.s32.totalorder %s340, %s343
      %p349 = scmp.eq.s32.totalorder %s42, 0
      %p350 = por %p348, %p349
      %p351 = scmp.ne.s32.totalorder %s340, %s343
      %p352 = scmp.eq.s32.totalorder %s47, 3
      %p353 = por %p351, %p352
      %p354 = scmp.ne.s32.totalorder %s343, %s344
      %p355 = scmp.eq.s32.totalorder %s47, 0
      %p356 = por %p354, %p355
      %p357 = scmp.ne.s32.totalorder %s343, %s344
      %p358 = scmp.eq.s32.totalorder %s48, 3
      %p359 = por %p357, %p358
      %p361 = scmp.ne.s32.totalorder %s344, %s360
      %p362 = scmp.eq.s32.totalorder %s48, 0
      %p363 = por %p361, %p362
      %s364 = ssub.s32 %s50, %s57
      %p365 = scmp.eq.s32.totalorder %s364, 0
      %s367 = sadd.s32 %s366, 1
      %s368 = scalar_select %p365, %s366, %s367
      %p371 = pneg %p365
      %p372 = scmp.eq.s32.totalorder %s42, 3
      %p373 = por %p371, %p372
      %p374 = scmp.ne.s32.totalorder %s366, %s369
      %p375 = scmp.eq.s32.totalorder %s42, 0
      %p376 = por %p374, %p375
      %p377 = scmp.ne.s32.totalorder %s366, %s369
      %p378 = scmp.eq.s32.totalorder %s47, 3
      %p379 = por %p377, %p378
      %p380 = scmp.ne.s32.totalorder %s369, %s370
      %p381 = scmp.eq.s32.totalorder %s47, 0
      %p382 = por %p380, %p381
      %p383 = scmp.ne.s32.totalorder %s369, %s370
      %p384 = scmp.eq.s32.totalorder %s48, 3
      %p385 = por %p383, %p384
      %p387 = scmp.ne.s32.totalorder %s370, %s386
      %p388 = scmp.eq.s32.totalorder %s48, 0
      %p389 = por %p387, %p388
      %s390 = ssub.s32 %s50, %s57
      %p391 = scmp.eq.s32.totalorder %s390, 0
      %s393 = sadd.s32 %s392, 1
      %s394 = scalar_select %p391, %s392, %s393
      %p397 = pneg %p391
      %p398 = scmp.eq.s32.totalorder %s42, 3
      %p399 = por %p397, %p398
      %p400 = scmp.ne.s32.totalorder %s392, %s395
      %p401 = scmp.eq.s32.totalorder %s42, 0
      %p402 = por %p400, %p401
      %p403 = scmp.ne.s32.totalorder %s392, %s395
      %p404 = scmp.eq.s32.totalorder %s47, 3
      %p405 = por %p403, %p404
      %p406 = scmp.ne.s32.totalorder %s395, %s396
      %p407 = scmp.eq.s32.totalorder %s47, 0
      %p408 = por %p406, %p407
      %p409 = scmp.ne.s32.totalorder %s395, %s396
      %p410 = scmp.eq.s32.totalorder %s48, 3
      %p411 = por %p409, %p410
      %p413 = scmp.ne.s32.totalorder %s396, %s412
      %p414 = scmp.eq.s32.totalorder %s48, 0
      %p415 = por %p413, %p414
      %s416 = ssub.s32 %s50, %s57
      %p417 = scmp.eq.s32.totalorder %s416, 0
      %s419 = sadd.s32 %s418, 1
      %s420 = scalar_select %p417, %s418, %s419
      %p423 = pneg %p417
      %p424 = scmp.eq.s32.totalorder %s42, 3
      %p425 = por %p423, %p424
      %p426 = scmp.ne.s32.totalorder %s418, %s421
      %p427 = scmp.eq.s32.totalorder %s42, 0
      %p428 = por %p426, %p427
      %p429 = scmp.ne.s32.totalorder %s418, %s421
      %p430 = scmp.eq.s32.totalorder %s47, 3
      %p431 = por %p429, %p430
      %p432 = scmp.ne.s32.totalorder %s421, %s422
      %p433 = scmp.eq.s32.totalorder %s47, 0
      %p434 = por %p432, %p433
      %p435 = scmp.ne.s32.totalorder %s421, %s422
      %p436 = scmp.eq.s32.totalorder %s48, 3
      %p437 = por %p435, %p436
      %p439 = scmp.ne.s32.totalorder %s422, %s438
      %p440 = scmp.eq.s32.totalorder %s48, 0
      %p441 = por %p439, %p440
      %s442 = ssub.s32 %s50, %s57
      %p443 = scmp.eq.s32.totalorder %s442, 0
      %s445 = sadd.s32 %s444, 1
      %s446 = scalar_select %p443, %s444, %s445
      %p449 = pneg %p443
      %p450 = scmp.eq.s32.totalorder %s42, 3
      %p451 = por %p449, %p450
      %p452 = scmp.ne.s32.totalorder %s444, %s447
      %p453 = scmp.eq.s32.totalorder %s42, 0
      %p454 = por %p452, %p453
      %p455 = scmp.ne.s32.totalorder %s444, %s447
      %p456 = scmp.eq.s32.totalorder %s47, 3
      %p457 = por %p455, %p456
      %p458 = scmp.ne.s32.totalorder %s447, %s448
      %p459 = scmp.eq.s32.totalorder %s47, 0
      %p460 = por %p458, %p459
      %p461 = scmp.ne.s32.totalorder %s447, %s448
      %p462 = scmp.eq.s32.totalorder %s48, 3
      %p463 = por %p461, %p462
      %p465 = scmp.ne.s32.totalorder %s448, %s464
      %p466 = scmp.eq.s32.totalorder %s48, 0
      %p467 = por %p465, %p466
      %s469 = sadd.s32 %s468, 1
      %p472 = scmp.eq.s32.totalorder %s42, 3
      %p473 = scmp.ne.s32.totalorder %s468, %s470
      %p474 = scmp.eq.s32.totalorder %s42, 0
      %p475 = por %p473, %p474
      %p476 = scmp.ne.s32.totalorder %s468, %s470
      %p477 = scmp.eq.s32.totalorder %s47, 3
      %p478 = por %p476, %p477
      %p479 = scmp.ne.s32.totalorder %s470, %s471
      %p480 = scmp.eq.s32.totalorder %s47, 0
      %p481 = por %p479, %p480
      %p482 = scmp.ne.s32.totalorder %s470, %s471
      %p483 = scmp.eq.s32.totalorder %s48, 3
      %p484 = por %p482, %p483
      %p486 = scmp.ne.s32.totalorder %s471, %s485
      %p487 = scmp.eq.s32.totalorder %s48, 0
      %p488 = por %p486, %p487
      %s490 = sadd.s32 %s489, 1
      %p493 = scmp.eq.s32.totalorder %s42, 3
      %p494 = scmp.ne.s32.totalorder %s489, %s491
      %p495 = scmp.eq.s32.totalorder %s42, 0
      %p496 = por %p494, %p495
      %p497 = scmp.ne.s32.totalorder %s489, %s491
      %p498 = scmp.eq.s32.totalorder %s47, 3
      %p499 = por %p497, %p498
      %p500 = scmp.ne.s32.totalorder %s491, %s492
      %p501 = scmp.eq.s32.totalorder %s47, 0
      %p502 = por %p500, %p501
      %p503 = scmp.ne.s32.totalorder %s491, %s492
      %p504 = scmp.eq.s32.totalorder %s48, 3
      %p505 = por %p503, %p504
      %p507 = scmp.ne.s32.totalorder %s492, %s506
      %p508 = scmp.eq.s32.totalorder %s48, 0
      %p509 = por %p507, %p508
      %s510 = ssub.s32 %s49, %s61
      %p511 = scmp.eq.s32.totalorder %s510, 0
      %s513 = sadd.s32 %s512, 1
      %s514 = scalar_select %p511, %s512, %s513
      %p517 = pneg %p511
      %p518 = scmp.eq.s32.totalorder %s42, 3
      %p519 = por %p517, %p518
      %p520 = scmp.ne.s32.totalorder %s512, %s515
      %p521 = scmp.eq.s32.totalorder %s42, 0
      %p522 = por %p520, %p521
      %p523 = scmp.ne.s32.totalorder %s512, %s515
      %p524 = scmp.eq.s32.totalorder %s47, 3
      %p525 = por %p523, %p524
      %p526 = scmp.ne.s32.totalorder %s515, %s516
      %p527 = scmp.eq.s32.totalorder %s47, 0
      %p528 = por %p526, %p527
      %p529 = scmp.ne.s32.totalorder %s515, %s516
      %p530 = scmp.eq.s32.totalorder %s48, 3
      %p531 = por %p529, %p530
      %p533 = scmp.ne.s32.totalorder %s516, %s532
      %p534 = scmp.eq.s32.totalorder %s48, 0
      %p535 = por %p533, %p534
      %p536 = scmp.le.s32.totalorder 1, %s42
      %p537 = scmp.lt.s32.totalorder %s42, 5
      %p538 = pnand %p536, %p537
      %p539 = pneg %p538
      // Predicated region
      $region9: #{tpu_custom_call.1} parent=5 // pred_check
        _
      $region10: #{tpu_custom_call.1} parent=5 // pred_check_branch
        %541 = sbr.rel (%p538) target = $region12
      $region11: #{tpu_custom_call.1} parent=5 // pred_region
        %s542 = ssub.s32 %s42, 1
        // Predicated region
        $region13: #{tpu_custom_call.1} parent=11 // pred_check
          %p543 = pneg %p127
        $region14: #{tpu_custom_call.1} parent=11 // pred_check_branch
          %545 = sbr.rel (%p543) target = $region16
        $region15: #{tpu_custom_call.1} parent=11 // pred_region
          _
        $region16: #{tpu_custom_call.1} parent=11 // pred_fallthru
          _
        // Predicated region
        $region17: #{tpu_custom_call.1} parent=11 // pred_check
          %p546 = pneg %p148
        $region18: #{tpu_custom_call.1} parent=11 // pred_check_branch
          %548 = sbr.rel (%p546) target = $region20
        $region19: #{tpu_custom_call.1} parent=11 // pred_region
          %s550 = ssub.s32 16, 16
          %551 = vsyncadd [#allocation7], %s550
          %s553 = sshll.u32 [#allocation8], 4
          %s554 = int_to_ptr.vmem [resolvable:$true] %s553
          %556 = dma.hbm_to_vmem [thread:$0]  %s3, 16, %s554, [#allocation7]
        $region20: #{tpu_custom_call.1} parent=11 // pred_fallthru
          _
        // Predicated region
        $region21: #{tpu_custom_call.1} parent=11 // pred_check
          %p557 = pneg %p481
        $region22: #{tpu_custom_call.1} parent=11 // pred_check_branch
          %559 = sbr.rel (%p557) target = $region24
        $region23: #{tpu_custom_call.1} parent=11 // pred_region
          _
        $region24: #{tpu_custom_call.1} parent=11 // pred_fallthru
          _
        // Predicated region
        $region25: #{tpu_custom_call.1} parent=11 // pred_check
          %p560 = pneg %p502
        $region26: #{tpu_custom_call.1} parent=11 // pred_check_branch
          %562 = sbr.rel (%p560) target = $region28
        $region27: #{tpu_custom_call.1} parent=11 // pred_region
          _
        $region28: #{tpu_custom_call.1} parent=11 // pred_fallthru
          _
      $region12: #{tpu_custom_call.1} parent=5 // pred_fallthru
        _
      %p563 = scmp.lt.s32.totalorder %s42, 4
      // Predicated region
      $region29: #{tpu_custom_call.1} parent=5 // pred_check
        %p564 = pneg %p563
      $region30: #{tpu_custom_call.1} parent=5 // pred_check_branch
        %566 = sbr.rel (%p564) target = $region32
      $region31: #{tpu_custom_call.1} parent=5 // pred_region
        // Predicated region
        $region33: #{tpu_custom_call.1} parent=31 // pred_check
          %p567 = pneg %p74
        $region34: #{tpu_custom_call.1} parent=31 // pred_check_branch
          %569 = sbr.rel (%p567) target = $region36
        $region35: #{tpu_custom_call.1} parent=31 // pred_region
          %s570 = sand.u32 %s64, 1
          %s571 = scalar_lea.sflag [#allocation4], %s570
          %s572 = sand.u32 %s64, 1
          %s573 = smul.addr %s572, 8
          %s574 = scalar_lea.vmem [#allocation3], %s573
          %s576 = ssub.s32 128, 128
          %577 = vsyncadd %s571, %s576
          %s578 = smul.addr %s49, 128
          %s579 = scalar_lea.hbm %s0, %s578
          %s581 = sshll.u32 %s574, 4
          %s582 = int_to_ptr.vmem [resolvable:$true] %s581
          %584 = dma.hbm_to_vmem [thread:$0]  %s579, 128, %s582, %s571
        $region36: #{tpu_custom_call.1} parent=31 // pred_fallthru
          _
        // Predicated region
        $region37: #{tpu_custom_call.1} parent=31 // pred_check
          %p585 = pneg %p100
        $region38: #{tpu_custom_call.1} parent=31 // pred_check_branch
          %587 = sbr.rel (%p585) target = $region40
        $region39: #{tpu_custom_call.1} parent=31 // pred_region
          %s588 = sand.u32 %s42, 1
          %s589 = scalar_lea.sflag [#allocation7], %s588
          %s590 = sand.u32 %s90, 1
          %s591 = scalar_lea.vmem [#allocation6], %s590
          %s593 = ssub.s32 16, 16
          %594 = vsyncadd %s589, %s593
          %s595 = smul.addr %s49, 16
          %s596 = scalar_lea.hbm %s1, %s595
          %s598 = sshll.u32 %s591, 4
          %s599 = int_to_ptr.vmem [resolvable:$true] %s598
          %601 = dma.hbm_to_vmem [thread:$0]  %s596, 16, %s599, %s589
        $region40: #{tpu_custom_call.1} parent=31 // pred_fallthru
          _
        // Predicated region
        $region41: #{tpu_custom_call.1} parent=31 // pred_check
          %p602 = pneg %p168
        $region42: #{tpu_custom_call.1} parent=31 // pred_check_branch
          %604 = sbr.rel (%p602) target = $region44
        $region43: #{tpu_custom_call.1} parent=31 // pred_region
          %p605 = scmp.lt.s32.totalorder %s50, 1
          %s606 = scalar_select %p605, %s50, 1
          %s607 = smul.addr %s606, 4
          %s608 = smul.addr %s607, 4
          %s609 = scalar_lea.vmem %s4, %s608
        $region44: #{tpu_custom_call.1} parent=31 // pred_fallthru
          _
        // Predicated region
        $region45: #{tpu_custom_call.1} parent=31 // pred_check
          %p610 = pneg %p194
        $region46: #{tpu_custom_call.1} parent=31 // pred_check_branch
          %612 = sbr.rel (%p610) target = $region48
        $region47: #{tpu_custom_call.1} parent=31 // pred_region
          %s613 = sand.u32 %s42, 1
          %s614 = scalar_lea.sflag [#allocation10], %s613
          %s615 = sand.u32 %s184, 1
          %s616 = scalar_lea.vmem [#allocation9], %s615
          %s618 = ssub.s32 16, 16
          %619 = vsyncadd %s614, %s618
          %s620 = smul.addr %s50, 16
          %s621 = scalar_lea.hbm %s5, %s620
          %s623 = sshll.u32 %s616, 4
          %s624 = int_to_ptr.vmem [resolvable:$true] %s623
          %626 = dma.hbm_to_vmem [thread:$0]  %s621, 16, %s624, %s614
        $region48: #{tpu_custom_call.1} parent=31 // pred_fallthru
          _
        // Predicated region
        $region49: #{tpu_custom_call.1} parent=31 // pred_check
          %p627 = pneg %p220
        $region50: #{tpu_custom_call.1} parent=31 // pred_check_branch
          %629 = sbr.rel (%p627) target = $region52
        $region51: #{tpu_custom_call.1} parent=31 // pred_region
          %p630 = scmp.lt.s32.totalorder %s50, 1
          %s631 = scalar_select %p630, %s50, 1
          %s632 = smul.addr %s631, 4
          %s633 = smul.addr %s632, 4
          %s634 = scalar_lea.vmem %s6, %s633
        $region52: #{tpu_custom_call.1} parent=31 // pred_fallthru
          _
        // Predicated region
        $region53: #{tpu_custom_call.1} parent=31 // pred_check
          %p635 = pneg %p246
        $region54: #{tpu_custom_call.1} parent=31 // pred_check_branch
          %637 = sbr.rel (%p635) target = $region56
        $region55: #{tpu_custom_call.1} parent=31 // pred_region
          %s638 = sand.u32 %s42, 1
          %s639 = scalar_lea.sflag [#allocation10], %s638
          %s640 = sand.u32 %s236, 1
          %s641 = scalar_lea.vmem [#allocation11], %s640
          %s643 = ssub.s32 16, 16
          %644 = vsyncadd %s639, %s643
          %s645 = smul.addr %s50, 16
          %s646 = scalar_lea.hbm %s7, %s645
          %s648 = sshll.u32 %s641, 4
          %s649 = int_to_ptr.vmem [resolvable:$true] %s648
          %651 = dma.hbm_to_vmem [thread:$0]  %s646, 16, %s649, %s639
        $region56: #{tpu_custom_call.1} parent=31 // pred_fallthru
          _
        // Predicated region
        $region57: #{tpu_custom_call.1} parent=31 // pred_check
          %p652 = pneg %p272
        $region58: #{tpu_custom_call.1} parent=31 // pred_check_branch
          %654 = sbr.rel (%p652) target = $region60
        $region59: #{tpu_custom_call.1} parent=31 // pred_region
          %s655 = sand.u32 %s42, 1
          %s656 = scalar_lea.sflag [#allocation13], %s655
          %s657 = sand.u32 %s262, 1
          %s658 = scalar_lea.vmem [#allocation12], %s657
          %s660 = ssub.s32 16, 16
          %661 = vsyncadd %s656, %s660
          %s662 = smul.addr %s50, 16
          %s663 = scalar_lea.hbm %s8, %s662
          %s665 = sshll.u32 %s658, 4
          %s666 = int_to_ptr.vmem [resolvable:$true] %s665
          %668 = dma.hbm_to_vmem [thread:$0]  %s663, 16, %s666, %s656
        $region60: #{tpu_custom_call.1} parent=31 // pred_fallthru
          _
        // Predicated region
        $region61: #{tpu_custom_call.1} parent=31 // pred_check
          %p669 = pneg %p298
        $region62: #{tpu_custom_call.1} parent=31 // pred_check_branch
          %671 = sbr.rel (%p669) target = $region64
        $region63: #{tpu_custom_call.1} parent=31 // pred_region
          %s672 = sand.u32 %s42, 1
          %s673 = scalar_lea.sflag [#allocation13], %s672
          %s674 = sand.u32 %s288, 1
          %s675 = scalar_lea.vmem [#allocation14], %s674
          %s677 = ssub.s32 16, 16
          %678 = vsyncadd %s673, %s677
          %s679 = smul.addr %s50, 16
          %s680 = scalar_lea.hbm %s9, %s679
          %s682 = sshll.u32 %s675, 4
          %s683 = int_to_ptr.vmem [resolvable:$true] %s682
          %685 = dma.hbm_to_vmem [thread:$0]  %s680, 16, %s683, %s673
        $region64: #{tpu_custom_call.1} parent=31 // pred_fallthru
          _
        // Predicated region
        $region65: #{tpu_custom_call.1} parent=31 // pred_check
          %p686 = pneg %p324
        $region66: #{tpu_custom_call.1} parent=31 // pred_check_branch
          %688 = sbr.rel (%p686) target = $region68
        $region67: #{tpu_custom_call.1} parent=31 // pred_region
          %p689 = scmp.lt.s32.totalorder %s50, 1
          %s690 = scalar_select %p689, %s50, 1
          %s691 = smul.addr %s690, 4
          %s692 = smul.addr %s691, 4
          %s693 = scalar_lea.vmem %s10, %s692
        $region68: #{tpu_custom_call.1} parent=31 // pred_fallthru
          _
        // Predicated region
        $region69: #{tpu_custom_call.1} parent=31 // pred_check
          %p694 = pneg %p350
        $region70: #{tpu_custom_call.1} parent=31 // pred_check_branch
          %696 = sbr.rel (%p694) target = $region72
        $region71: #{tpu_custom_call.1} parent=31 // pred_region
          %s697 = sand.u32 %s42, 1
          %s698 = scalar_lea.sflag [#allocation16], %s697
          %s699 = sand.u32 %s340, 1
          %s700 = scalar_lea.vmem [#allocation15], %s699
          %s702 = ssub.s32 16, 16
          %703 = vsyncadd %s698, %s702
          %s704 = smul.addr %s50, 16
          %s705 = scalar_lea.hbm %s11, %s704
          %s707 = sshll.u32 %s700, 4
          %s708 = int_to_ptr.vmem [resolvable:$true] %s707
          %710 = dma.hbm_to_vmem [thread:$0]  %s705, 16, %s708, %s698
        $region72: #{tpu_custom_call.1} parent=31 // pred_fallthru
          _
        // Predicated region
        $region73: #{tpu_custom_call.1} parent=31 // pred_check
          %p711 = pneg %p376
        $region74: #{tpu_custom_call.1} parent=31 // pred_check_branch
          %713 = sbr.rel (%p711) target = $region76
        $region75: #{tpu_custom_call.1} parent=31 // pred_region
          %p714 = scmp.lt.s32.totalorder %s50, 1
          %s715 = scalar_select %p714, %s50, 1
          %s716 = smul.addr %s715, 8
          %s717 = smul.addr %s716, 4
          %s718 = scalar_lea.vmem %s12, %s717
        $region76: #{tpu_custom_call.1} parent=31 // pred_fallthru
          _
        // Predicated region
        $region77: #{tpu_custom_call.1} parent=31 // pred_check
          %p719 = pneg %p402
        $region78: #{tpu_custom_call.1} parent=31 // pred_check_branch
          %721 = sbr.rel (%p719) target = $region80
        $region79: #{tpu_custom_call.1} parent=31 // pred_region
          %s722 = sand.u32 %s42, 1
          %s723 = scalar_lea.sflag [#allocation16], %s722
          %s724 = sand.u32 %s392, 1
          %s725 = scalar_lea.vmem [#allocation17], %s724
          %s727 = ssub.s32 16, 16
          %728 = vsyncadd %s723, %s727
          %s729 = smul.addr %s50, 16
          %s730 = scalar_lea.hbm %s13, %s729
          %s732 = sshll.u32 %s725, 4
          %s733 = int_to_ptr.vmem [resolvable:$true] %s732
          %735 = dma.hbm_to_vmem [thread:$0]  %s730, 16, %s733, %s723
        $region80: #{tpu_custom_call.1} parent=31 // pred_fallthru
          _
        // Predicated region
        $region81: #{tpu_custom_call.1} parent=31 // pred_check
          %p736 = pneg %p428
        $region82: #{tpu_custom_call.1} parent=31 // pred_check_branch
          %738 = sbr.rel (%p736) target = $region84
        $region83: #{tpu_custom_call.1} parent=31 // pred_region
          %p739 = scmp.lt.s32.totalorder %s50, 1
          %s740 = scalar_select %p739, %s50, 1
          %s741 = scalar_lea.vmem %s14, %s740
        $region84: #{tpu_custom_call.1} parent=31 // pred_fallthru
          _
        // Predicated region
        $region85: #{tpu_custom_call.1} parent=31 // pred_check
          %p742 = pneg %p454
        $region86: #{tpu_custom_call.1} parent=31 // pred_check_branch
          %744 = sbr.rel (%p742) target = $region88
        $region87: #{tpu_custom_call.1} parent=31 // pred_region
          %p745 = scmp.lt.s32.totalorder %s50, 1
          %s746 = scalar_select %p745, %s50, 1
          %s747 = scalar_lea.vmem %s15, %s746
        $region88: #{tpu_custom_call.1} parent=31 // pred_fallthru
          _
      $region32: #{tpu_custom_call.1} parent=5 // pred_fallthru
        _
      %p748 = scmp.le.s32.totalorder 1, %s42
      %p749 = scmp.lt.s32.totalorder %s42, 5
      %p750 = pnand %p748, %p749
      %p751 = pneg %p750
      // Predicated region
      $region89: #{tpu_custom_call.1} parent=5 // pred_check
        _
      $region90: #{tpu_custom_call.1} parent=5 // pred_check_branch
        %753 = sbr.rel (%p750) target = $region92
      $region91: #{tpu_custom_call.1} parent=5 // pred_region
        %s754 = ssub.s32 %s42, 1
        %s755 = sand.u32 %s67, 1
        %s756 = scalar_lea.sflag [#allocation4], %s755
        %s757 = sand.u32 %s67, 1
        %s758 = smul.addr %s757, 8
        %s759 = scalar_lea.vmem [#allocation3], %s758
        // Predicated region
        $region93: #{tpu_custom_call.1} parent=91 // pred_check
          %p760 = pneg %p80
        $region94: #{tpu_custom_call.1} parent=91 // pred_check_branch
          %762 = sbr.rel (%p760) target = $region96
        $region95: #{tpu_custom_call.1} parent=91 // pred_region
          %763 = dma.done %s756, 128
        $region96: #{tpu_custom_call.1} parent=91 // pred_fallthru
          _
        %s764 = sand.u32 %s47, 1
        %s765 = scalar_lea.sflag [#allocation7], %s764
        %s766 = sand.u32 %s93, 1
        %s767 = scalar_lea.vmem [#allocation6], %s766
        // Predicated region
        $region97: #{tpu_custom_call.1} parent=91 // pred_check
          %p768 = pneg %p106
        $region98: #{tpu_custom_call.1} parent=91 // pred_check_branch
          %770 = sbr.rel (%p768) target = $region100
        $region99: #{tpu_custom_call.1} parent=91 // pred_region
          %771 = dma.done %s765, 16
        $region100: #{tpu_custom_call.1} parent=91 // pred_fallthru
          _
        // Predicated region
        $region101: #{tpu_custom_call.1} parent=91 // pred_check
          %p772 = pneg %p148
        $region102: #{tpu_custom_call.1} parent=91 // pred_check_branch
          %774 = sbr.rel (%p772) target = $region104
        $region103: #{tpu_custom_call.1} parent=91 // pred_region
          %775 = dma.done [#allocation7], 16
        $region104: #{tpu_custom_call.1} parent=91 // pred_fallthru
          _
        %s776 = sand.u32 %s47, 1
        %s777 = scalar_lea.sflag [#allocation10], %s776
        %s778 = sand.u32 %s187, 1
        %s779 = scalar_lea.vmem [#allocation9], %s778
        // Predicated region
        $region105: #{tpu_custom_call.1} parent=91 // pred_check
          %p780 = pneg %p200
        $region106: #{tpu_custom_call.1} parent=91 // pred_check_branch
          %782 = sbr.rel (%p780) target = $region108
        $region107: #{tpu_custom_call.1} parent=91 // pred_region
          %783 = dma.done %s777, 16
        $region108: #{tpu_custom_call.1} parent=91 // pred_fallthru
          _
        %s784 = sand.u32 %s47, 1
        %s785 = scalar_lea.sflag [#allocation10], %s784
        %s786 = sand.u32 %s239, 1
        %s787 = scalar_lea.vmem [#allocation11], %s786
        // Predicated region
        $region109: #{tpu_custom_call.1} parent=91 // pred_check
          %p788 = pneg %p252
        $region110: #{tpu_custom_call.1} parent=91 // pred_check_branch
          %790 = sbr.rel (%p788) target = $region112
        $region111: #{tpu_custom_call.1} parent=91 // pred_region
          %791 = dma.done %s785, 16
        $region112: #{tpu_custom_call.1} parent=91 // pred_fallthru
          _
        %s792 = sand.u32 %s47, 1
        %s793 = scalar_lea.sflag [#allocation13], %s792
        %s794 = sand.u32 %s265, 1
        %s795 = scalar_lea.vmem [#allocation12], %s794
        // Predicated region
        $region113: #{tpu_custom_call.1} parent=91 // pred_check
          %p796 = pneg %p278
        $region114: #{tpu_custom_call.1} parent=91 // pred_check_branch
          %798 = sbr.rel (%p796) target = $region116
        $region115: #{tpu_custom_call.1} parent=91 // pred_region
          %799 = dma.done %s793, 16
        $region116: #{tpu_custom_call.1} parent=91 // pred_fallthru
          _
        %s800 = sand.u32 %s47, 1
        %s801 = scalar_lea.sflag [#allocation13], %s800
        %s802 = sand.u32 %s291, 1
        %s803 = scalar_lea.vmem [#allocation14], %s802
        // Predicated region
        $region117: #{tpu_custom_call.1} parent=91 // pred_check
          %p804 = pneg %p304
        $region118: #{tpu_custom_call.1} parent=91 // pred_check_branch
          %806 = sbr.rel (%p804) target = $region120
        $region119: #{tpu_custom_call.1} parent=91 // pred_region
          %807 = dma.done %s801, 16
        $region120: #{tpu_custom_call.1} parent=91 // pred_fallthru
          _
        %s808 = sand.u32 %s47, 1
        %s809 = scalar_lea.sflag [#allocation16], %s808
        %s810 = sand.u32 %s343, 1
        %s811 = scalar_lea.vmem [#allocation15], %s810
        // Predicated region
        $region121: #{tpu_custom_call.1} parent=91 // pred_check
          %p812 = pneg %p356
        $region122: #{tpu_custom_call.1} parent=91 // pred_check_branch
          %814 = sbr.rel (%p812) target = $region124
        $region123: #{tpu_custom_call.1} parent=91 // pred_region
          %815 = dma.done %s809, 16
        $region124: #{tpu_custom_call.1} parent=91 // pred_fallthru
          _
        %s816 = sand.u32 %s47, 1
        %s817 = scalar_lea.sflag [#allocation16], %s816
        %s818 = sand.u32 %s395, 1
        %s819 = scalar_lea.vmem [#allocation17], %s818
        // Predicated region
        $region125: #{tpu_custom_call.1} parent=91 // pred_check
          %p820 = pneg %p408
        $region126: #{tpu_custom_call.1} parent=91 // pred_check_branch
          %822 = sbr.rel (%p820) target = $region128
        $region127: #{tpu_custom_call.1} parent=91 // pred_region
          %823 = dma.done %s817, 16
        $region128: #{tpu_custom_call.1} parent=91 // pred_fallthru
          _
        %s824 = sand.u32 %s67, 1
        %s825 = scalar_lea.sflag [#allocation4], %s824
        %s826 = sand.u32 %s67, 1
        %s827 = smul.addr %s826, 8
        %s828 = scalar_lea.vmem [#allocation3], %s827
        %p829 = pneg %p80
        %p830 = pneg %p77
        %s831 = sand.u32 %s47, 1
        %s832 = scalar_lea.sflag [#allocation7], %s831
        %s833 = sand.u32 %s93, 1
        %s834 = scalar_lea.vmem [#allocation6], %s833
        %p835 = pneg %p106
        %p836 = pneg %p103
        %p837 = pneg %p127
        %p838 = pneg %p124
        %p839 = pneg %p148
        %p840 = pneg %p145
        %p841 = scmp.lt.s32.totalorder %s52, 1
        %s842 = scalar_select %p841, %s52, 1
        %s843 = smul.addr %s842, 4
        %s844 = smul.addr %s843, 4
        %s845 = scalar_lea.vmem %s4, %s844
        %p846 = pneg %p174
        %p847 = pneg %p171
        %s848 = sand.u32 %s47, 1
        %s849 = scalar_lea.sflag [#allocation10], %s848
        %s850 = sand.u32 %s187, 1
        %s851 = scalar_lea.vmem [#allocation9], %s850
        %p852 = pneg %p200
        %p853 = pneg %p197
        %p854 = scmp.lt.s32.totalorder %s52, 1
        %s855 = scalar_select %p854, %s52, 1
        %s856 = smul.addr %s855, 4
        %s857 = smul.addr %s856, 4
        %s858 = scalar_lea.vmem %s6, %s857
        %p859 = pneg %p226
        %p860 = pneg %p223
        %s861 = sand.u32 %s47, 1
        %s862 = scalar_lea.sflag [#allocation10], %s861
        %s863 = sand.u32 %s239, 1
        %s864 = scalar_lea.vmem [#allocation11], %s863
        %p865 = pneg %p252
        %p866 = pneg %p249
        %s867 = sand.u32 %s47, 1
        %s868 = scalar_lea.sflag [#allocation13], %s867
        %s869 = sand.u32 %s265, 1
        %s870 = scalar_lea.vmem [#allocation12], %s869
        %p871 = pneg %p278
        %p872 = pneg %p275
        %s873 = sand.u32 %s47, 1
        %s874 = scalar_lea.sflag [#allocation13], %s873
        %s875 = sand.u32 %s291, 1
        %s876 = scalar_lea.vmem [#allocation14], %s875
        %p877 = pneg %p304
        %p878 = pneg %p301
        %p879 = scmp.lt.s32.totalorder %s52, 1
        %s880 = scalar_select %p879, %s52, 1
        %s881 = smul.addr %s880, 4
        %s882 = smul.addr %s881, 4
        %s883 = scalar_lea.vmem %s10, %s882
        %p884 = pneg %p330
        %p885 = pneg %p327
        %s886 = sand.u32 %s47, 1
        %s887 = scalar_lea.sflag [#allocation16], %s886
        %s888 = sand.u32 %s343, 1
        %s889 = scalar_lea.vmem [#allocation15], %s888
        %p890 = pneg %p356
        %p891 = pneg %p353
        %p892 = scmp.lt.s32.totalorder %s52, 1
        %s893 = scalar_select %p892, %s52, 1
        %s894 = smul.addr %s893, 8
        %s895 = smul.addr %s894, 4
        %s896 = scalar_lea.vmem %s12, %s895
        %p897 = pneg %p382
        %p898 = pneg %p379
        %s899 = sand.u32 %s47, 1
        %s900 = scalar_lea.sflag [#allocation16], %s899
        %s901 = sand.u32 %s395, 1
        %s902 = scalar_lea.vmem [#allocation17], %s901
        %p903 = pneg %p408
        %p904 = pneg %p405
        %p905 = scmp.lt.s32.totalorder %s52, 1
        %s906 = scalar_select %p905, %s52, 1
        %s907 = scalar_lea.vmem %s14, %s906
        %p908 = pneg %p434
        %p909 = pneg %p431
        %p910 = scmp.lt.s32.totalorder %s52, 1
        %s911 = scalar_select %p910, %s52, 1
        %s912 = scalar_lea.vmem %s15, %s911
        %p913 = pneg %p460
        %p914 = pneg %p457
        %p915 = pneg %p481
        %p916 = pneg %p478
        %p917 = pneg %p502
        %p918 = pneg %p499
        %p919 = pneg %p528
        %p920 = pneg %p525
        %s921 = sand.u32 %s515, 1
        %s922 = scalar_lea.sflag [#allocation5], %s921
        %s923 = sand.u32 %s515, 1
        %s924 = scalar_lea.vmem [#allocation18], %s923
        %p925 = scmp.lt.s32.totalorder %s52, 1
        %s926 = scalar_select %p925, %s52, 1
        %s927 = smul.addr %s926, 4
        %s928 = smul.addr %s927, 4
        %s929 = scalar_lea.vmem %s4, %s928
        %p930 = scmp.lt.s32.totalorder %s52, 1
        %s931 = scalar_select %p930, %s52, 1
        %s932 = smul.addr %s931, 4
        %s933 = smul.addr %s932, 4
        %s934 = scalar_lea.vmem %s6, %s933
        %p935 = scmp.lt.s32.totalorder %s52, 1
        %s936 = scalar_select %p935, %s52, 1
        %s937 = smul.addr %s936, 4
        %s938 = smul.addr %s937, 4
        %s939 = scalar_lea.vmem %s10, %s938
        %p940 = scmp.lt.s32.totalorder %s52, 1
        %s941 = scalar_select %p940, %s52, 1
        %s942 = smul.addr %s941, 8
        %s943 = smul.addr %s942, 4
        %s944 = scalar_lea.vmem %s12, %s943
        %p945 = scmp.lt.s32.totalorder %s52, 1
        %s946 = scalar_select %p945, %s52, 1
        %s947 = scalar_lea.vmem %s14, %s946
        %p948 = scmp.lt.s32.totalorder %s52, 1
        %s949 = scalar_select %p948, %s52, 1
        %s950 = scalar_lea.vmem %s15, %s949
        %p952 = scmp.eq.s32.totalorder %s52, 0
        // Predicated region
        $region129: #{tpu_custom_call.1} parent=91 // pred_check
          %p953 = pneg %p952
        $region130: #{tpu_custom_call.1} parent=91 // pred_check_branch
          %955 = sbr.rel (%p953) target = $region132
        $region131: #{tpu_custom_call.1} parent=91 // pred_region
          %v956 = vld [vmem:[%s759] sm:$0xff]
          %v957 = vld [vmem:[%s2] sm:$0x1]
          %v958 = vld [vmem:[#allocation8] sm:$0x1]
          %vm959 = vcmask 261120
          %v960 = vsel %vm959, %v956, 0.0
          %961 = vadd.xlane.f32.xlu0 %v960
          %v962 = vpop.xlane.xlu0 %961
          %v963 = vrcp.pop 32.0
          %v964 = vmul.f32 %v962, %v963
          %v965 = vsub.f32 %v956, %v964
          %v966 = vmul.f32 %v965, %v965
          %v967 = vsel %vm959, %v966, 0.0
          %968 = vadd.xlane.f32.xlu0 %v967
          %v969 = vpop.xlane.xlu0 %968
          %v970 = vmul.f32 %v969, %v963
          %v971 = vadd.f32 %v970, 1e-12
          %v972 = vrsqrt.pop %v971
          %v973 = vmul.f32 %v965, %v972
          %v975 = vlaneseq
          %v976 = vshrl.u32 %v975, 7
          %v977 = vsub.s32 0, %v976
          %v978 = vrot.slane %v957, %v977
          %v980 = vmul.f32 %v973, %v978
          %v982 = vlaneseq
          %v983 = vshrl.u32 %v982, 7
          %v984 = vsub.s32 0, %v983
          %v985 = vrot.slane %v958, %v984
          %v987 = vadd.f32 %v980, %v985
          %988 = vst.msk [vmem:[#allocation2] sm:$0xff] %vm959, %v987
        $region132: #{tpu_custom_call.1} parent=91 // pred_fallthru
          _
        %v989 = vld [vmem:[#allocation2] sm:$0xff]
        %v990 = vld [vmem:[%s929] sm:$0xf]
        %v991 = vld [vmem:[%s929 + $0x4] sm:$0xf]
        %v992 = vld [vmem:[%s929 + $0x8] sm:$0xf]
        %v993 = vld [vmem:[%s929 + $0xc] sm:$0xf]
        %v994 = vpack.c.bf16 %v989, %v989
        %v995 = vld [vmem:[%s779] sm:$0x1]
        %v997 = vlaneseq
        %v998 = vshrl.u32 %v997, 7
        %v999 = vsub.s32 0, %v998
        %v1000 = vrot.slane %v995, %v999
        %v1006 = vunpack.c.l.b16 %v990
        %v1007 = vunpack.c.l.b16 %v991
        %v1008 = vunpack.c.l.b16 %v992
        %v1009 = vunpack.c.l.b16 %v993
        %v1010 = vpack.c.b16 %v1007, %v1006
        %v1011 = vpack.c.b16 %v1009, %v1008
        %vm1014 = vcmask 261120
        %v1016 = vsel %vm1014, %v994, 0
        %1018 = vmatprep.subr.bf16.mxu0 0
        %1019 = vmatpush1.bf16.msra.mxu0 %v1010
        %1020 = vmatprep.subr.bf16.mxu0 0
        %1021 = vmatpush1.bf16.msra.mxu0 %v1011
        %1022 = vmatprep.subr.bf16.mxu0 0
        %1023 = vmatpush1.bf16.msra.mxu0 0
        %1024 = vmatprep.subr.bf16.mxu0 0
        %1025 = vmatpush1.bf16.msra.mxu0 0
        %1026 = vmatprep.subr.bf16.mxu0 0
        %1027 = vmatpush1.bf16.msra.mxu0 0
        %1028 = vmatprep.subr.bf16.mxu0 0
        %1029 = vmatpush1.bf16.msra.mxu0 0
        %1030 = vmatprep.subr.bf16.mxu0 0
        %1031 = vmatpush1.bf16.msra.mxu0 0
        %1032 = vmatprep.subr.bf16.mxu0 0
        %1033 = vmatpush1.bf16.msra.mxu0 0
        %1034 = vmatprep.subr.bf16.mxu0 0
        %1035 = vmatpush1.bf16.msra.mxu0 0
        %1036 = vmatprep.subr.bf16.mxu0 0
        %1037 = vmatpush1.bf16.msra.mxu0 0
        %1038 = vmatprep.subr.bf16.mxu0 0
        %1039 = vmatpush1.bf16.msra.mxu0 0
        %1040 = vmatprep.subr.bf16.mxu0 0
        %1041 = vmatpush1.bf16.msra.mxu0 0
        %1042 = vmatprep.subr.bf16.mxu0 0
        %1043 = vmatpush1.bf16.msra.mxu0 0
        %1044 = vmatprep.subr.bf16.mxu0 0
        %1045 = vmatpush1.bf16.msra.mxu0 0
        %1046 = vmatprep.subr.bf16.mxu0 0
        %1047 = vmatpush1.bf16.msra.mxu0 0
        %1048 = vmatprep.subr.bf16.mxu0 0
        %1049 = vmatpush1.bf16.msra.mxu0 0
        %1050 = vmatprep.mubr.bf16.mxu0 0
        %1051 = vmatmul.mubr.bf16.gmra.mrb[0].mxu0 %v1016
        %v1052 = vpop.f32.mrb[0].mxu0
        %v1053 = vadd.f32 %v1000, %v1052
        %v1054 = vpop.f32.mrb[0].mxu0
        %v1055 = vpop.f32.mrb[0].mxu0
        %v1056 = vpop.f32.mrb[0].mxu0
        %1057 = vdwg.mxu0
        %v1058 = vld [vmem:[%s767] sm:$0x1]
        %v1060 = vlaneseq
        %v1061 = vshrl.u32 %v1060, 7
        %v1062 = vsub.s32 0, %v1061
        %v1063 = vrot.slane %v1058, %v1062
        %v1065 = vpack.c.bf16 %v1053, %v1053
        %1067 = vrot.lane.b32.xlu0 %v1065, 96
        %v1068 = vpop.permute.xlu0 %1067
        %vm1069 = vcmask 64512
        %v1071 = vsel %vm1069, %v1065, 0
        %v1074 = vsel %vm1069, %v1068, 0
        %1076 = vmatprep.subr.bf16.mxu0 0
        %1077 = vmatpush1.bf16.xpose.msra.mxu0 %v1074
        %1078 = vmatprep.subr.bf16.mxu0 0
        %1079 = vmatpush1.bf16.xpose.msra.mxu0 0
        %1080 = vmatprep.subr.bf16.mxu0 0
        %1081 = vmatpush1.bf16.xpose.msra.mxu0 0
        %1082 = vmatprep.subr.bf16.mxu0 0
        %1083 = vmatpush1.bf16.xpose.msra.mxu0 0
        %1084 = vmatprep.subr.bf16.mxu0 0
        %1085 = vmatpush1.bf16.xpose.msra.mxu0 0
        %1086 = vmatprep.subr.bf16.mxu0 0
        %1087 = vmatpush1.bf16.xpose.msra.mxu0 0
        %1088 = vmatprep.subr.bf16.mxu0 0
        %1089 = vmatpush1.bf16.xpose.msra.mxu0 0
        %1090 = vmatprep.subr.bf16.mxu0 0
        %1091 = vmatpush1.bf16.xpose.msra.mxu0 0
        %1092 = vmatprep.subr.bf16.mxu0 0
        %1093 = vmatpush1.bf16.xpose.msra.mxu0 0
        %1094 = vmatprep.subr.bf16.mxu0 0
        %1095 = vmatpush1.bf16.xpose.msra.mxu0 0
        %1096 = vmatprep.subr.bf16.mxu0 0
        %1097 = vmatpush1.bf16.xpose.msra.mxu0 0
        %1098 = vmatprep.subr.bf16.mxu0 0
        %1099 = vmatpush1.bf16.xpose.msra.mxu0 0
        %1100 = vmatprep.subr.bf16.mxu0 0
        %1101 = vmatpush1.bf16.xpose.msra.mxu0 0
        %1102 = vmatprep.subr.bf16.mxu0 0
        %1103 = vmatpush1.bf16.xpose.msra.mxu0 0
        %1104 = vmatprep.subr.bf16.mxu0 0
        %1105 = vmatpush1.bf16.xpose.msra.mxu0 0
        %1106 = vmatprep.subr.bf16.mxu0 0
        %1107 = vmatpush1.bf16.xpose.msra.mxu0 0
        %1108 = vmatprep.mubr.bf16.mxu0 0
        %1109 = vmatmul.mubr.bf16.gmra.mrb[0].mxu0 %v1071
        %v1110 = vpop.f32.mrb[0].mxu0
        %v1111 = vadd.f32 %v1063, %v1110
        %v1112 = vpop.f32.mrb[0].mxu0
        %v1113 = vpop.f32.mrb[0].mxu0
        %v1114 = vpop.f32.mrb[0].mxu0
        %1115 = vdwg.mxu0
        %v1116 = vsel %vm1069, %v1111, -inf
        %1117 = vmax.xlane.f32.xlu0 %v1116
        %v1118 = vpop.xlane.xlu0 %1117
        %v1119 = vsub.f32 %v1111, %v1118
        %v1120 = vmul.f32 %v1119, 1.442695
        %v1121 = vpow.pop %v1120
        %v1122 = vsel %vm1069, %v1121, 0.0
        %1123 = vadd.xlane.f32.xlu0 %v1122
        %v1124 = vpop.xlane.xlu0 %1123
        %v1125 = vrcp.pop %v1124
        %v1126 = vmul.f32 %v1121, %v1125
        %v1127 = vpack.c.bf16 %v1126, %v1126
        %1128 = vrot.lane.b32.xlu0 %v1065, 64
        %v1129 = vpop.permute.xlu0 %1128
        %v1131 = vsel %vm1069, %v1127, 0
        %vm1133 = vcmask 1043456
        %v1135 = vsel %vm1133, %v1129, 0
        %1137 = vmatprep.subr.bf16.mxu0 0
        %1138 = vmatpush1.bf16.msra.mxu0 %v1135
        %1139 = vmatprep.subr.bf16.mxu0 0
        %1140 = vmatpush1.bf16.msra.mxu0 0
        %1141 = vmatprep.subr.bf16.mxu0 0
        %1142 = vmatpush1.bf16.msra.mxu0 0
        %1143 = vmatprep.subr.bf16.mxu0 0
        %1144 = vmatpush1.bf16.msra.mxu0 0
        %1145 = vmatprep.subr.bf16.mxu0 0
        %1146 = vmatpush1.bf16.msra.mxu0 0
        %1147 = vmatprep.subr.bf16.mxu0 0
        %1148 = vmatpush1.bf16.msra.mxu0 0
        %1149 = vmatprep.subr.bf16.mxu0 0
        %1150 = vmatpush1.bf16.msra.mxu0 0
        %1151 = vmatprep.subr.bf16.mxu0 0
        %1152 = vmatpush1.bf16.msra.mxu0 0
        %1153 = vmatprep.subr.bf16.mxu0 0
        %1154 = vmatpush1.bf16.msra.mxu0 0
        %1155 = vmatprep.subr.bf16.mxu0 0
        %1156 = vmatpush1.bf16.msra.mxu0 0
        %1157 = vmatprep.subr.bf16.mxu0 0
        %1158 = vmatpush1.bf16.msra.mxu0 0
        %1159 = vmatprep.subr.bf16.mxu0 0
        %1160 = vmatpush1.bf16.msra.mxu0 0
        %1161 = vmatprep.subr.bf16.mxu0 0
        %1162 = vmatpush1.bf16.msra.mxu0 0
        %1163 = vmatprep.subr.bf16.mxu0 0
        %1164 = vmatpush1.bf16.msra.mxu0 0
        %1165 = vmatprep.subr.bf16.mxu0 0
        %1166 = vmatpush1.bf16.msra.mxu0 0
        %1167 = vmatprep.subr.bf16.mxu0 0
        %1168 = vmatpush1.bf16.msra.mxu0 0
        %1169 = vmatprep.mubr.bf16.mxu0 0
        %1170 = vmatmul.mubr.bf16.gmra.mrb[0].mxu0 %v1131
        %v1171 = vpop.f32.mrb[0].mxu0
        %v1172 = vadd.f32 0.0, %v1171
        %v1173 = vpop.f32.mrb[0].mxu0
        %v1174 = vpop.f32.mrb[0].mxu0
        %v1175 = vpop.f32.mrb[0].mxu0
        %1176 = vdwg.mxu0
        %1177 = vrot.lane.b32.xlu0 %v1065, 120
        %v1178 = vpop.permute.xlu0 %1177
        %1179 = vrot.lane.b32.xlu0 %v1065, 88
        %v1180 = vpop.permute.xlu0 %1179
        %v1182 = vsel %vm1069, %v1178, 0
        %v1185 = vsel %vm1069, %v1180, 0
        %1187 = vmatprep.subr.bf16.mxu0 0
        %1188 = vmatpush1.bf16.xpose.msra.mxu0 %v1185
        %1189 = vmatprep.subr.bf16.mxu0 0
        %1190 = vmatpush1.bf16.xpose.msra.mxu0 0
        %1191 = vmatprep.subr.bf16.mxu0 0
        %1192 = vmatpush1.bf16.xpose.msra.mxu0 0
        %1193 = vmatprep.subr.bf16.mxu0 0
        %1194 = vmatpush1.bf16.xpose.msra.mxu0 0
        %1195 = vmatprep.subr.bf16.mxu0 0
        %1196 = vmatpush1.bf16.xpose.msra.mxu0 0
        %1197 = vmatprep.subr.bf16.mxu0 0
        %1198 = vmatpush1.bf16.xpose.msra.mxu0 0
        %1199 = vmatprep.subr.bf16.mxu0 0
        %1200 = vmatpush1.bf16.xpose.msra.mxu0 0
        %1201 = vmatprep.subr.bf16.mxu0 0
        %1202 = vmatpush1.bf16.xpose.msra.mxu0 0
        %1203 = vmatprep.subr.bf16.mxu0 0
        %1204 = vmatpush1.bf16.xpose.msra.mxu0 0
        %1205 = vmatprep.subr.bf16.mxu0 0
        %1206 = vmatpush1.bf16.xpose.msra.mxu0 0
        %1207 = vmatprep.subr.bf16.mxu0 0
        %1208 = vmatpush1.bf16.xpose.msra.mxu0 0
        %1209 = vmatprep.subr.bf16.mxu0 0
        %1210 = vmatpush1.bf16.xpose.msra.mxu0 0
        %1211 = vmatprep.subr.bf16.mxu0 0
        %1212 = vmatpush1.bf16.xpose.msra.mxu0 0
        %1213 = vmatprep.subr.bf16.mxu0 0
        %1214 = vmatpush1.bf16.xpose.msra.mxu0 0
        %1215 = vmatprep.subr.bf16.mxu0 0
        %1216 = vmatpush1.bf16.xpose.msra.mxu0 0
        %1217 = vmatprep.subr.bf16.mxu0 0
        %1218 = vmatpush1.bf16.xpose.msra.mxu0 0
        %1219 = vmatprep.mubr.bf16.mxu0 0
        %1220 = vmatmul.mubr.bf16.gmra.mrb[0].mxu0 %v1182
        %v1221 = vpop.f32.mrb[0].mxu0
        %v1222 = vadd.f32 %v1063, %v1221
        %v1223 = vpop.f32.mrb[0].mxu0
        %v1224 = vpop.f32.mrb[0].mxu0
        %v1225 = vpop.f32.mrb[0].mxu0
        %1226 = vdwg.mxu0
        %v1227 = vsel %vm1069, %v1222, -inf
        %1228 = vmax.xlane.f32.xlu0 %v1227
        %v1229 = vpop.xlane.xlu0 %1228
        %v1230 = vsub.f32 %v1222, %v1229
        %v1231 = vmul.f32 %v1230, 1.442695
        %v1232 = vpow.pop %v1231
        %v1233 = vsel %vm1069, %v1232, 0.0
        %1234 = vadd.xlane.f32.xlu0 %v1233
        %v1235 = vpop.xlane.xlu0 %1234
        %v1236 = vrcp.pop %v1235
        %v1237 = vmul.f32 %v1232, %v1236
        %v1238 = vpack.c.bf16 %v1237, %v1237
        %1239 = vrot.lane.b32.xlu0 %v1065, 56
        %v1240 = vpop.permute.xlu0 %1239
        %v1242 = vsel %vm1069, %v1238, 0
        %v1245 = vsel %vm1133, %v1240, 0
        %1247 = vmatprep.subr.bf16.mxu0 0
        %1248 = vmatpush1.bf16.msra.mxu0 %v1245
        %1249 = vmatprep.subr.bf16.mxu0 0
        %1250 = vmatpush1.bf16.msra.mxu0 0
        %1251 = vmatprep.subr.bf16.mxu0 0
        %1252 = vmatpush1.bf16.msra.mxu0 0
        %1253 = vmatprep.subr.bf16.mxu0 0
        %1254 = vmatpush1.bf16.msra.mxu0 0
        %1255 = vmatprep.subr.bf16.mxu0 0
        %1256 = vmatpush1.bf16.msra.mxu0 0
        %1257 = vmatprep.subr.bf16.mxu0 0
        %1258 = vmatpush1.bf16.msra.mxu0 0
        %1259 = vmatprep.subr.bf16.mxu0 0
        %1260 = vmatpush1.bf16.msra.mxu0 0
        %1261 = vmatprep.subr.bf16.mxu0 0
        %1262 = vmatpush1.bf16.msra.mxu0 0
        %1263 = vmatprep.subr.bf16.mxu0 0
        %1264 = vmatpush1.bf16.msra.mxu0 0
        %1265 = vmatprep.subr.bf16.mxu0 0
        %1266 = vmatpush1.bf16.msra.mxu0 0
        %1267 = vmatprep.subr.bf16.mxu0 0
        %1268 = vmatpush1.bf16.msra.mxu0 0
        %1269 = vmatprep.subr.bf16.mxu0 0
        %1270 = vmatpush1.bf16.msra.mxu0 0
        %1271 = vmatprep.subr.bf16.mxu0 0
        %1272 = vmatpush1.bf16.msra.mxu0 0
        %1273 = vmatprep.subr.bf16.mxu0 0
        %1274 = vmatpush1.bf16.msra.mxu0 0
        %1275 = vmatprep.subr.bf16.mxu0 0
        %1276 = vmatpush1.bf16.msra.mxu0 0
        %1277 = vmatprep.subr.bf16.mxu0 0
        %1278 = vmatpush1.bf16.msra.mxu0 0
        %1279 = vmatprep.mubr.bf16.mxu0 0
        %1280 = vmatmul.mubr.bf16.gmra.mrb[0].mxu0 %v1242
        %v1281 = vpop.f32.mrb[0].mxu0
        %v1282 = vadd.f32 0.0, %v1281
        %v1283 = vpop.f32.mrb[0].mxu0
        %v1284 = vpop.f32.mrb[0].mxu0
        %v1285 = vpop.f32.mrb[0].mxu0
        %1286 = vdwg.mxu0
        %1287 = vrot.lane.b32.xlu0 %v1065, 112
        %v1288 = vpop.permute.xlu0 %1287
        %1289 = vrot.lane.b32.xlu0 %v1065, 80
        %v1290 = vpop.permute.xlu0 %1289
        %v1292 = vsel %vm1069, %v1288, 0
        %v1295 = vsel %vm1069, %v1290, 0
        %1297 = vmatprep.subr.bf16.mxu0 0
        %1298 = vmatpush1.bf16.xpose.msra.mxu0 %v1295
        %1299 = vmatprep.subr.bf16.mxu0 0
        %1300 = vmatpush1.bf16.xpose.msra.mxu0 0
        %1301 = vmatprep.subr.bf16.mxu0 0
        %1302 = vmatpush1.bf16.xpose.msra.mxu0 0
        %1303 = vmatprep.subr.bf16.mxu0 0
        %1304 = vmatpush1.bf16.xpose.msra.mxu0 0
        %1305 = vmatprep.subr.bf16.mxu0 0
        %1306 = vmatpush1.bf16.xpose.msra.mxu0 0
        %1307 = vmatprep.subr.bf16.mxu0 0
        %1308 = vmatpush1.bf16.xpose.msra.mxu0 0
        %1309 = vmatprep.subr.bf16.mxu0 0
        %1310 = vmatpush1.bf16.xpose.msra.mxu0 0
        %1311 = vmatprep.subr.bf16.mxu0 0
        %1312 = vmatpush1.bf16.xpose.msra.mxu0 0
        %1313 = vmatprep.subr.bf16.mxu0 0
        %1314 = vmatpush1.bf16.xpose.msra.mxu0 0
        %1315 = vmatprep.subr.bf16.mxu0 0
        %1316 = vmatpush1.bf16.xpose.msra.mxu0 0
        %1317 = vmatprep.subr.bf16.mxu0 0
        %1318 = vmatpush1.bf16.xpose.msra.mxu0 0
        %1319 = vmatprep.subr.bf16.mxu0 0
        %1320 = vmatpush1.bf16.xpose.msra.mxu0 0
        %1321 = vmatprep.subr.bf16.mxu0 0
        %1322 = vmatpush1.bf16.xpose.msra.mxu0 0
        %1323 = vmatprep.subr.bf16.mxu0 0
        %1324 = vmatpush1.bf16.xpose.msra.mxu0 0
        %1325 = vmatprep.subr.bf16.mxu0 0
        %1326 = vmatpush1.bf16.xpose.msra.mxu0 0
        %1327 = vmatprep.subr.bf16.mxu0 0
        %1328 = vmatpush1.bf16.xpose.msra.mxu0 0
        %1329 = vmatprep.mubr.bf16.mxu0 0
        %1330 = vmatmul.mubr.bf16.gmra.mrb[0].mxu0 %v1292
        %v1331 = vpop.f32.mrb[0].mxu0
        %v1332 = vadd.f32 %v1063, %v1331
        %v1333 = vpop.f32.mrb[0].mxu0
        %v1334 = vpop.f32.mrb[0].mxu0
        %v1335 = vpop.f32.mrb[0].mxu0
        %1336 = vdwg.mxu0
        %v1337 = vsel %vm1069, %v1332, -inf
        %1338 = vmax.xlane.f32.xlu0 %v1337
        %v1339 = vpop.xlane.xlu0 %1338
        %v1340 = vsub.f32 %v1332, %v1339
        %v1341 = vmul.f32 %v1340, 1.442695
        %v1342 = vpow.pop %v1341
        %v1343 = vsel %vm1069, %v1342, 0.0
        %1344 = vadd.xlane.f32.xlu0 %v1343
        %v1345 = vpop.xlane.xlu0 %1344
        %v1346 = vrcp.pop %v1345
        %v1347 = vmul.f32 %v1342, %v1346
        %v1348 = vpack.c.bf16 %v1347, %v1347
        %1349 = vrot.lane.b32.xlu0 %v1065, 48
        %v1350 = vpop.permute.xlu0 %1349
        %v1352 = vsel %vm1069, %v1348, 0
        %v1355 = vsel %vm1133, %v1350, 0
        %1357 = vmatprep.subr.bf16.mxu0 0
        %1358 = vmatpush1.bf16.msra.mxu0 %v1355
        %1359 = vmatprep.subr.bf16.mxu0 0
        %1360 = vmatpush1.bf16.msra.mxu0 0
        %1361 = vmatprep.subr.bf16.mxu0 0
        %1362 = vmatpush1.bf16.msra.mxu0 0
        %1363 = vmatprep.subr.bf16.mxu0 0
        %1364 = vmatpush1.bf16.msra.mxu0 0
        %1365 = vmatprep.subr.bf16.mxu0 0
        %1366 = vmatpush1.bf16.msra.mxu0 0
        %1367 = vmatprep.subr.bf16.mxu0 0
        %1368 = vmatpush1.bf16.msra.mxu0 0
        %1369 = vmatprep.subr.bf16.mxu0 0
        %1370 = vmatpush1.bf16.msra.mxu0 0
        %1371 = vmatprep.subr.bf16.mxu0 0
        %1372 = vmatpush1.bf16.msra.mxu0 0
        %1373 = vmatprep.subr.bf16.mxu0 0
        %1374 = vmatpush1.bf16.msra.mxu0 0
        %1375 = vmatprep.subr.bf16.mxu0 0
        %1376 = vmatpush1.bf16.msra.mxu0 0
        %1377 = vmatprep.subr.bf16.mxu0 0
        %1378 = vmatpush1.bf16.msra.mxu0 0
        %1379 = vmatprep.subr.bf16.mxu0 0
        %1380 = vmatpush1.bf16.msra.mxu0 0
        %1381 = vmatprep.subr.bf16.mxu0 0
        %1382 = vmatpush1.bf16.msra.mxu0 0
        %1383 = vmatprep.subr.bf16.mxu0 0
        %1384 = vmatpush1.bf16.msra.mxu0 0
        %1385 = vmatprep.subr.bf16.mxu0 0
        %1386 = vmatpush1.bf16.msra.mxu0 0
        %1387 = vmatprep.subr.bf16.mxu0 0
        %1388 = vmatpush1.bf16.msra.mxu0 0
        %1389 = vmatprep.mubr.bf16.mxu0 0
        %1390 = vmatmul.mubr.bf16.gmra.mrb[0].mxu0 %v1352
        %v1391 = vpop.f32.mrb[0].mxu0
        %v1392 = vadd.f32 0.0, %v1391
        %v1393 = vpop.f32.mrb[0].mxu0
        %v1394 = vpop.f32.mrb[0].mxu0
        %v1395 = vpop.f32.mrb[0].mxu0
        %1396 = vdwg.mxu0
        %1397 = vrot.lane.b32.xlu0 %v1065, 104
        %v1398 = vpop.permute.xlu0 %1397
        %1399 = vrot.lane.b32.xlu0 %v1065, 72
        %v1400 = vpop.permute.xlu0 %1399
        %v1402 = vsel %vm1069, %v1398, 0
        %v1405 = vsel %vm1069, %v1400, 0
        %1407 = vmatprep.subr.bf16.mxu0 0
        %1408 = vmatpush1.bf16.xpose.msra.mxu0 %v1405
        %1409 = vmatprep.subr.bf16.mxu0 0
        %1410 = vmatpush1.bf16.xpose.msra.mxu0 0
        %1411 = vmatprep.subr.bf16.mxu0 0
        %1412 = vmatpush1.bf16.xpose.msra.mxu0 0
        %1413 = vmatprep.subr.bf16.mxu0 0
        %1414 = vmatpush1.bf16.xpose.msra.mxu0 0
        %1415 = vmatprep.subr.bf16.mxu0 0
        %1416 = vmatpush1.bf16.xpose.msra.mxu0 0
        %1417 = vmatprep.subr.bf16.mxu0 0
        %1418 = vmatpush1.bf16.xpose.msra.mxu0 0
        %1419 = vmatprep.subr.bf16.mxu0 0
        %1420 = vmatpush1.bf16.xpose.msra.mxu0 0
        %1421 = vmatprep.subr.bf16.mxu0 0
        %1422 = vmatpush1.bf16.xpose.msra.mxu0 0
        %1423 = vmatprep.subr.bf16.mxu0 0
        %1424 = vmatpush1.bf16.xpose.msra.mxu0 0
        %1425 = vmatprep.subr.bf16.mxu0 0
        %1426 = vmatpush1.bf16.xpose.msra.mxu0 0
        %1427 = vmatprep.subr.bf16.mxu0 0
        %1428 = vmatpush1.bf16.xpose.msra.mxu0 0
        %1429 = vmatprep.subr.bf16.mxu0 0
        %1430 = vmatpush1.bf16.xpose.msra.mxu0 0
        %1431 = vmatprep.subr.bf16.mxu0 0
        %1432 = vmatpush1.bf16.xpose.msra.mxu0 0
        %1433 = vmatprep.subr.bf16.mxu0 0
        %1434 = vmatpush1.bf16.xpose.msra.mxu0 0
        %1435 = vmatprep.subr.bf16.mxu0 0
        %1436 = vmatpush1.bf16.xpose.msra.mxu0 0
        %1437 = vmatprep.subr.bf16.mxu0 0
        %1438 = vmatpush1.bf16.xpose.msra.mxu0 0
        %1439 = vmatprep.mubr.bf16.mxu0 0
        %1440 = vmatmul.mubr.bf16.gmra.mrb[0].mxu0 %v1402
        %v1441 = vpop.f32.mrb[0].mxu0
        %v1442 = vadd.f32 %v1063, %v1441
        %v1443 = vpop.f32.mrb[0].mxu0
        %v1444 = vpop.f32.mrb[0].mxu0
        %v1445 = vpop.f32.mrb[0].mxu0
        %1446 = vdwg.mxu0
        %v1447 = vsel %vm1069, %v1442, -inf
        %1448 = vmax.xlane.f32.xlu0 %v1447
        %v1449 = vpop.xlane.xlu0 %1448
        %v1450 = vsub.f32 %v1442, %v1449
        %v1451 = vmul.f32 %v1450, 1.442695
        %v1452 = vpow.pop %v1451
        %v1453 = vsel %vm1069, %v1452, 0.0
        %1454 = vadd.xlane.f32.xlu0 %v1453
        %v1455 = vpop.xlane.xlu0 %1454
        %v1456 = vrcp.pop %v1455
        %v1457 = vmul.f32 %v1452, %v1456
        %v1458 = vpack.c.bf16 %v1457, %v1457
        %1459 = vrot.lane.b32.xlu0 %v1065, 40
        %v1460 = vpop.permute.xlu0 %1459
        %v1462 = vsel %vm1069, %v1458, 0
        %v1465 = vsel %vm1133, %v1460, 0
        %1467 = vmatprep.subr.bf16.mxu0 0
        %1468 = vmatpush1.bf16.msra.mxu0 %v1465
        %1469 = vmatprep.subr.bf16.mxu0 0
        %1470 = vmatpush1.bf16.msra.mxu0 0
        %1471 = vmatprep.subr.bf16.mxu0 0
        %1472 = vmatpush1.bf16.msra.mxu0 0
        %1473 = vmatprep.subr.bf16.mxu0 0
        %1474 = vmatpush1.bf16.msra.mxu0 0
        %1475 = vmatprep.subr.bf16.mxu0 0
        %1476 = vmatpush1.bf16.msra.mxu0 0
        %1477 = vmatprep.subr.bf16.mxu0 0
        %1478 = vmatpush1.bf16.msra.mxu0 0
        %1479 = vmatprep.subr.bf16.mxu0 0
        %1480 = vmatpush1.bf16.msra.mxu0 0
        %1481 = vmatprep.subr.bf16.mxu0 0
        %1482 = vmatpush1.bf16.msra.mxu0 0
        %1483 = vmatprep.subr.bf16.mxu0 0
        %1484 = vmatpush1.bf16.msra.mxu0 0
        %1485 = vmatprep.subr.bf16.mxu0 0
        %1486 = vmatpush1.bf16.msra.mxu0 0
        %1487 = vmatprep.subr.bf16.mxu0 0
        %1488 = vmatpush1.bf16.msra.mxu0 0
        %1489 = vmatprep.subr.bf16.mxu0 0
        %1490 = vmatpush1.bf16.msra.mxu0 0
        %1491 = vmatprep.subr.bf16.mxu0 0
        %1492 = vmatpush1.bf16.msra.mxu0 0
        %1493 = vmatprep.subr.bf16.mxu0 0
        %1494 = vmatpush1.bf16.msra.mxu0 0
        %1495 = vmatprep.subr.bf16.mxu0 0
        %1496 = vmatpush1.bf16.msra.mxu0 0
        %1497 = vmatprep.subr.bf16.mxu0 0
        %1498 = vmatpush1.bf16.msra.mxu0 0
        %1499 = vmatprep.mubr.bf16.mxu0 0
        %1500 = vmatmul.mubr.bf16.gmra.mrb[0].mxu0 %v1462
        %v1501 = vpop.f32.mrb[0].mxu0
        %v1502 = vadd.f32 0.0, %v1501
        %v1503 = vpop.f32.mrb[0].mxu0
        %v1504 = vpop.f32.mrb[0].mxu0
        %v1505 = vpop.f32.mrb[0].mxu0
        %1506 = vdwg.mxu0
        %1508 = vrot.lane.b32.xlu0 %v1282, 8
        %v1509 = vpop.permute.xlu0 %1508
        %1512 = vrot.lane.b32.xlu0 %v1392, 16
        %v1513 = vpop.permute.xlu0 %1512
        %1516 = vrot.lane.b32.xlu0 %v1502, 24
        %v1517 = vpop.permute.xlu0 %1516
        %v1519 = vsel %vm1069, %v1172, %v1509
        %vm1520 = vcmask 130048
        %v1521 = vsel %vm1520, %v1519, %v1513
        %vm1522 = vcmask 195584
        %v1523 = vsel %vm1522, %v1521, %v1517
        %v1524 = vld [vmem:[%s934] sm:$0xf]
        %v1525 = vld [vmem:[%s934 + $0x4] sm:$0xf]
        %v1526 = vld [vmem:[%s934 + $0x8] sm:$0xf]
        %v1527 = vld [vmem:[%s934 + $0xc] sm:$0xf]
        %v1528 = vpack.c.bf16 %v1523, %v1523
        %v1529 = vld [vmem:[%s787] sm:$0x1]
        %v1531 = vlaneseq
        %v1532 = vshrl.u32 %v1531, 7
        %v1533 = vsub.s32 0, %v1532
        %v1534 = vrot.slane %v1529, %v1533
        %v1540 = vunpack.c.l.b16 %v1524
        %v1541 = vunpack.c.l.b16 %v1525
        %v1542 = vunpack.c.l.b16 %v1526
        %v1543 = vunpack.c.l.b16 %v1527
        %v1544 = vpack.c.b16 %v1541, %v1540
        %v1545 = vpack.c.b16 %v1543, %v1542
        %v1549 = vsel %vm1014, %v1528, 0
        %1551 = vmatprep.subr.bf16.mxu0 0
        %1552 = vmatpush1.bf16.msra.mxu0 %v1544
        %1553 = vmatprep.subr.bf16.mxu0 0
        %1554 = vmatpush1.bf16.msra.mxu0 %v1545
        %1555 = vmatprep.subr.bf16.mxu0 0
        %1556 = vmatpush1.bf16.msra.mxu0 0
        %1557 = vmatprep.subr.bf16.mxu0 0
        %1558 = vmatpush1.bf16.msra.mxu0 0
        %1559 = vmatprep.subr.bf16.mxu0 0
        %1560 = vmatpush1.bf16.msra.mxu0 0
        %1561 = vmatprep.subr.bf16.mxu0 0
        %1562 = vmatpush1.bf16.msra.mxu0 0
        %1563 = vmatprep.subr.bf16.mxu0 0
        %1564 = vmatpush1.bf16.msra.mxu0 0
        %1565 = vmatprep.subr.bf16.mxu0 0
        %1566 = vmatpush1.bf16.msra.mxu0 0
        %1567 = vmatprep.subr.bf16.mxu0 0
        %1568 = vmatpush1.bf16.msra.mxu0 0
        %1569 = vmatprep.subr.bf16.mxu0 0
        %1570 = vmatpush1.bf16.msra.mxu0 0
        %1571 = vmatprep.subr.bf16.mxu0 0
        %1572 = vmatpush1.bf16.msra.mxu0 0
        %1573 = vmatprep.subr.bf16.mxu0 0
        %1574 = vmatpush1.bf16.msra.mxu0 0
        %1575 = vmatprep.subr.bf16.mxu0 0
        %1576 = vmatpush1.bf16.msra.mxu0 0
        %1577 = vmatprep.subr.bf16.mxu0 0
        %1578 = vmatpush1.bf16.msra.mxu0 0
        %1579 = vmatprep.subr.bf16.mxu0 0
        %1580 = vmatpush1.bf16.msra.mxu0 0
        %1581 = vmatprep.subr.bf16.mxu0 0
        %1582 = vmatpush1.bf16.msra.mxu0 0
        %1583 = vmatprep.mubr.bf16.mxu0 0
        %1584 = vmatmul.mubr.bf16.gmra.mrb[0].mxu0 %v1549
        %v1585 = vpop.f32.mrb[0].mxu0
        %v1586 = vadd.f32 %v1534, %v1585
        %v1587 = vpop.f32.mrb[0].mxu0
        %v1588 = vpop.f32.mrb[0].mxu0
        %v1589 = vpop.f32.mrb[0].mxu0
        %1590 = vdwg.mxu0
        %v1591 = vadd.f32 %v989, %v1586
        %v1592 = vld [vmem:[%s795] sm:$0x1]
        %v1593 = vld [vmem:[%s803] sm:$0x1]
        %v1594 = vsel %vm1014, %v1591, 0.0
        %1595 = vadd.xlane.f32.xlu0 %v1594
        %v1596 = vpop.xlane.xlu0 %1595
        %v1597 = vrcp.pop 32.0
        %v1598 = vmul.f32 %v1596, %v1597
        %v1599 = vsub.f32 %v1591, %v1598
        %v1600 = vmul.f32 %v1599, %v1599
        %v1601 = vsel %vm1014, %v1600, 0.0
        %1602 = vadd.xlane.f32.xlu0 %v1601
        %v1603 = vpop.xlane.xlu0 %1602
        %v1604 = vmul.f32 %v1603, %v1597
        %v1605 = vadd.f32 %v1604, 1e-12
        %v1606 = vrsqrt.pop %v1605
        %v1607 = vmul.f32 %v1599, %v1606
        %v1609 = vlaneseq
        %v1610 = vshrl.u32 %v1609, 7
        %v1611 = vsub.s32 0, %v1610
        %v1612 = vrot.slane %v1592, %v1611
        %v1614 = vmul.f32 %v1607, %v1612
        %v1616 = vlaneseq
        %v1617 = vshrl.u32 %v1616, 7
        %v1618 = vsub.s32 0, %v1617
        %v1619 = vrot.slane %v1593, %v1618
        %v1621 = vadd.f32 %v1614, %v1619
        %v1622 = vld [vmem:[%s939] sm:$0xf]
        %v1623 = vld [vmem:[%s939 + $0x4] sm:$0xf]
        %v1624 = vld [vmem:[%s939 + $0x8] sm:$0xf]
        %v1625 = vld [vmem:[%s939 + $0xc] sm:$0xf]
        %v1626 = vpack.c.bf16 %v1621, %v1621
        %v1627 = vld [vmem:[%s811] sm:$0x1]
        %v1629 = vlaneseq
        %v1630 = vshrl.u32 %v1629, 7
        %v1631 = vsub.s32 0, %v1630
        %v1632 = vrot.slane %v1627, %v1631
        %v1638 = vunpack.c.l.b16 %v1622
        %v1639 = vunpack.c.l.b16 %v1623
        %v1640 = vunpack.c.l.b16 %v1624
        %v1641 = vunpack.c.l.b16 %v1625
        %v1642 = vpack.c.b16 %v1639, %v1638
        %v1643 = vpack.c.b16 %v1641, %v1640
        %v1647 = vsel %vm1014, %v1626, 0
        %1649 = vmatprep.subr.bf16.mxu0 0
        %1650 = vmatpush1.bf16.msra.mxu0 %v1642
        %1651 = vmatprep.subr.bf16.mxu0 0
        %1652 = vmatpush1.bf16.msra.mxu0 %v1643
        %1653 = vmatprep.subr.bf16.mxu0 0
        %1654 = vmatpush1.bf16.msra.mxu0 0
        %1655 = vmatprep.subr.bf16.mxu0 0
        %1656 = vmatpush1.bf16.msra.mxu0 0
        %1657 = vmatprep.subr.bf16.mxu0 0
        %1658 = vmatpush1.bf16.msra.mxu0 0
        %1659 = vmatprep.subr.bf16.mxu0 0
        %1660 = vmatpush1.bf16.msra.mxu0 0
        %1661 = vmatprep.subr.bf16.mxu0 0
        %1662 = vmatpush1.bf16.msra.mxu0 0
        %1663 = vmatprep.subr.bf16.mxu0 0
        %1664 = vmatpush1.bf16.msra.mxu0 0
        %1665 = vmatprep.subr.bf16.mxu0 0
        %1666 = vmatpush1.bf16.msra.mxu0 0
        %1667 = vmatprep.subr.bf16.mxu0 0
        %1668 = vmatpush1.bf16.msra.mxu0 0
        %1669 = vmatprep.subr.bf16.mxu0 0
        %1670 = vmatpush1.bf16.msra.mxu0 0
        %1671 = vmatprep.subr.bf16.mxu0 0
        %1672 = vmatpush1.bf16.msra.mxu0 0
        %1673 = vmatprep.subr.bf16.mxu0 0
        %1674 = vmatpush1.bf16.msra.mxu0 0
        %1675 = vmatprep.subr.bf16.mxu0 0
        %1676 = vmatpush1.bf16.msra.mxu0 0
        %1677 = vmatprep.subr.bf16.mxu0 0
        %1678 = vmatpush1.bf16.msra.mxu0 0
        %1679 = vmatprep.subr.bf16.mxu0 0
        %1680 = vmatpush1.bf16.msra.mxu0 0
        %1681 = vmatprep.mubr.bf16.mxu0 0
        %1682 = vmatmul.mubr.bf16.gmra.mrb[0].mxu0 %v1647
        %v1683 = vpop.f32.mrb[0].mxu0
        %v1684 = vadd.f32 %v1632, %v1683
        %v1685 = vpop.f32.mrb[0].mxu0
        %v1686 = vpop.f32.mrb[0].mxu0
        %v1687 = vpop.f32.mrb[0].mxu0
        %1688 = vdwg.mxu0
        %v1689 = vmul.f32 %v1684, 0.5
        %v1690 = vmul.f32 %v1684, 0.044715
        %v1691 = vmul.f32 %v1690, %v1684
        %v1692 = vmul.f32 %v1691, %v1684
        %v1693 = vadd.f32 %v1684, %v1692
        %v1694 = vmul.f32 %v1693, 0.7978846
        %v1695 = vtanh.pop %v1694
        %v1696 = vadd.f32 %v1695, 1.0
        %v1697 = vmul.f32 %v1689, %v1696
        %v1698 = vld [vmem:[%s944] sm:$0xf]
        %v1699 = vld [vmem:[%s944 + $0x4] sm:$0xf]
        %v1700 = vld [vmem:[%s944 + $0x8] sm:$0xf]
        %v1701 = vld [vmem:[%s944 + $0xc] sm:$0xf]
        %v1702 = vld [vmem:[%s944 + $0x10] sm:$0xf]
        %v1703 = vld [vmem:[%s944 + $0x14] sm:$0xf]
        %v1704 = vld [vmem:[%s944 + $0x18] sm:$0xf]
        %v1705 = vld [vmem:[%s944 + $0x1c] sm:$0xf]
        %v1706 = vpack.c.bf16 %v1697, %v1697
        %v1707 = vld [vmem:[%s819] sm:$0x1]
        %v1709 = vlaneseq
        %v1710 = vshrl.u32 %v1709, 7
        %v1711 = vsub.s32 0, %v1710
        %v1712 = vrot.slane %v1707, %v1711
        %v1722 = vunpack.c.l.b16 %v1698
        %v1723 = vunpack.c.l.b16 %v1699
        %v1724 = vunpack.c.l.b16 %v1700
        %v1725 = vunpack.c.l.b16 %v1701
        %v1726 = vunpack.c.l.b16 %v1702
        %v1727 = vunpack.c.l.b16 %v1703
        %v1728 = vunpack.c.l.b16 %v1704
        %v1729 = vunpack.c.l.b16 %v1705
        %v1730 = vpack.c.b16 %v1723, %v1722
        %v1731 = vpack.c.b16 %v1725, %v1724
        %v1732 = vpack.c.b16 %v1727, %v1726
        %v1733 = vpack.c.b16 %v1729, %v1728
        %vm1738 = vcmask 523264
        %v1740 = vsel %vm1738, %v1706, 0
        %1742 = vmatprep.subr.bf16.mxu0 0
        %1743 = vmatpush1.bf16.msra.mxu0 %v1730
        %1744 = vmatprep.subr.bf16.mxu0 0
        %1745 = vmatpush1.bf16.msra.mxu0 %v1731
        %1746 = vmatprep.subr.bf16.mxu0 0
        %1747 = vmatpush1.bf16.msra.mxu0 %v1732
        %1748 = vmatprep.subr.bf16.mxu0 0
        %1749 = vmatpush1.bf16.msra.mxu0 %v1733
        %1750 = vmatprep.subr.bf16.mxu0 0
        %1751 = vmatpush1.bf16.msra.mxu0 0
        %1752 = vmatprep.subr.bf16.mxu0 0
        %1753 = vmatpush1.bf16.msra.mxu0 0
        %1754 = vmatprep.subr.bf16.mxu0 0
        %1755 = vmatpush1.bf16.msra.mxu0 0
        %1756 = vmatprep.subr.bf16.mxu0 0
        %1757 = vmatpush1.bf16.msra.mxu0 0
        %1758 = vmatprep.subr.bf16.mxu0 0
        %1759 = vmatpush1.bf16.msra.mxu0 0
        %1760 = vmatprep.subr.bf16.mxu0 0
        %1761 = vmatpush1.bf16.msra.mxu0 0
        %1762 = vmatprep.subr.bf16.mxu0 0
        %1763 = vmatpush1.bf16.msra.mxu0 0
        %1764 = vmatprep.subr.bf16.mxu0 0
        %1765 = vmatpush1.bf16.msra.mxu0 0
        %1766 = vmatprep.subr.bf16.mxu0 0
        %1767 = vmatpush1.bf16.msra.mxu0 0
        %1768 = vmatprep.subr.bf16.mxu0 0
        %1769 = vmatpush1.bf16.msra.mxu0 0
        %1770 = vmatprep.subr.bf16.mxu0 0
        %1771 = vmatpush1.bf16.msra.mxu0 0
        %1772 = vmatprep.subr.bf16.mxu0 0
        %1773 = vmatpush1.bf16.msra.mxu0 0
        %1774 = vmatprep.mubr.bf16.mxu0 0
        %1775 = vmatmul.mubr.bf16.gmra.mrb[0].mxu0 %v1740
        %v1776 = vpop.f32.mrb[0].mxu0
        %v1777 = vadd.f32 %v1712, %v1776
        %v1778 = vpop.f32.mrb[0].mxu0
        %v1779 = vpop.f32.mrb[0].mxu0
        %v1780 = vpop.f32.mrb[0].mxu0
        %1781 = vdwg.mxu0
        %v1782 = vadd.f32 %v1621, %v1777
        %v1783 = vld [vmem:[%s947] sm:$0x1]
        %v1784 = vld [vmem:[%s950] sm:$0x1]
        %v1785 = vsel %vm1014, %v1782, 0.0
        %1786 = vadd.xlane.f32.xlu0 %v1785
        %v1787 = vpop.xlane.xlu0 %1786
        %v1788 = vmul.f32 %v1787, %v1597
        %v1789 = vsub.f32 %v1782, %v1788
        %v1790 = vmul.f32 %v1789, %v1789
        %v1791 = vsel %vm1014, %v1790, 0.0
        %1792 = vadd.xlane.f32.xlu0 %v1791
        %v1793 = vpop.xlane.xlu0 %1792
        %v1794 = vmul.f32 %v1793, %v1597
        %v1795 = vadd.f32 %v1794, 1e-12
        %v1796 = vrsqrt.pop %v1795
        %v1797 = vmul.f32 %v1789, %v1796
        %v1799 = vlaneseq
        %v1800 = vshrl.u32 %v1799, 7
        %v1801 = vsub.s32 0, %v1800
        %v1802 = vrot.slane %v1783, %v1801
        %v1804 = vmul.f32 %v1797, %v1802
        %v1806 = vlaneseq
        %v1807 = vshrl.u32 %v1806, 7
        %v1808 = vsub.s32 0, %v1807
        %v1809 = vrot.slane %v1784, %v1808
        %v1811 = vadd.f32 %v1804, %v1809
        %1812 = vst.msk [vmem:[#allocation2] sm:$0xff] %vm1014, %v1811
        %p1813 = scmp.eq.s32.totalorder %s52, 1
        // Predicated region
        $region133: #{tpu_custom_call.1} parent=91 // pred_check
          %p1814 = pneg %p1813
        $region134: #{tpu_custom_call.1} parent=91 // pred_check_branch
          %1816 = sbr.rel (%p1814) target = $region136
        $region135: #{tpu_custom_call.1} parent=91 // pred_region
          %v1817 = vld [vmem:[%s16] sm:$0xf]
          %v1818 = vld [vmem:[%s16 + $0x4] sm:$0xf]
          %v1819 = vld [vmem:[%s16 + $0x8] sm:$0xf]
          %v1820 = vld [vmem:[%s16 + $0xc] sm:$0xf]
          %v1821 = vpack.c.bf16 %v1811, %v1811
          %v1822 = vld [vmem:[%s17] sm:$0x1]
          %v1827 = vunpack.c.l.b16 %v1817
          %v1828 = vunpack.c.l.b16 %v1818
          %v1829 = vunpack.c.l.b16 %v1819
          %v1830 = vunpack.c.l.b16 %v1820
          %v1831 = vpack.c.b16 %v1828, %v1827
          %v1832 = vpack.c.b16 %v1830, %v1829
          %v1836 = vsel %vm1014, %v1821, 0
          %1838 = vmatprep.subr.bf16.mxu0 0
          %1839 = vmatpush1.bf16.msra.mxu0 %v1831
          %1840 = vmatprep.subr.bf16.mxu0 0
          %1841 = vmatpush1.bf16.msra.mxu0 %v1832
          %1842 = vmatprep.subr.bf16.mxu0 0
          %1843 = vmatpush1.bf16.msra.mxu0 0
          %1844 = vmatprep.subr.bf16.mxu0 0
          %1845 = vmatpush1.bf16.msra.mxu0 0
          %1846 = vmatprep.subr.bf16.mxu0 0
          %1847 = vmatpush1.bf16.msra.mxu0 0
          %1848 = vmatprep.subr.bf16.mxu0 0
          %1849 = vmatpush1.bf16.msra.mxu0 0
          %1850 = vmatprep.subr.bf16.mxu0 0
          %1851 = vmatpush1.bf16.msra.mxu0 0
          %1852 = vmatprep.subr.bf16.mxu0 0
          %1853 = vmatpush1.bf16.msra.mxu0 0
          %1854 = vmatprep.subr.bf16.mxu0 0
          %1855 = vmatpush1.bf16.msra.mxu0 0
          %1856 = vmatprep.subr.bf16.mxu0 0
          %1857 = vmatpush1.bf16.msra.mxu0 0
          %1858 = vmatprep.subr.bf16.mxu0 0
          %1859 = vmatpush1.bf16.msra.mxu0 0
          %1860 = vmatprep.subr.bf16.mxu0 0
          %1861 = vmatpush1.bf16.msra.mxu0 0
          %1862 = vmatprep.subr.bf16.mxu0 0
          %1863 = vmatpush1.bf16.msra.mxu0 0
          %1864 = vmatprep.subr.bf16.mxu0 0
          %1865 = vmatpush1.bf16.msra.mxu0 0
          %1866 = vmatprep.subr.bf16.mxu0 0
          %1867 = vmatpush1.bf16.msra.mxu0 0
          %1868 = vmatprep.subr.bf16.mxu0 0
          %1869 = vmatpush1.bf16.msra.mxu0 0
          %1870 = vmatprep.mubr.bf16.mxu0 0
          %1871 = vmatmul.mubr.bf16.gmra.mrb[0].mxu0 %v1836
          %v1872 = vpop.f32.mrb[0].mxu0
          %v1873 = vadd.f32 %v1822, %v1872
          %v1874 = vpop.f32.mrb[0].mxu0
          %v1875 = vpop.f32.mrb[0].mxu0
          %v1876 = vpop.f32.mrb[0].mxu0
          %1877 = vdwg.mxu0
          %v1878 = vtanh.pop %v1873
          %vm1879 = vcmask 253952
          %1880 = vst.msk [vmem:[%s924] sm:$0x1] %vm1879, %v1878
        $region136: #{tpu_custom_call.1} parent=91 // pred_fallthru
          _
        %s1881 = sand.u32 %s515, 1
        %s1882 = scalar_lea.sflag [#allocation5], %s1881
        %s1883 = sand.u32 %s515, 1
        %s1884 = scalar_lea.vmem [#allocation18], %s1883
        // Predicated region
        $region137: #{tpu_custom_call.1} parent=91 // pred_check
          %p1885 = pneg %p525
        $region138: #{tpu_custom_call.1} parent=91 // pred_check_branch
          %1887 = sbr.rel (%p1885) target = $region140
        $region139: #{tpu_custom_call.1} parent=91 // pred_region
          %s1889 = ssub.s32 16, 16
          %1890 = vsyncadd %s1882, %s1889
          %s1891 = smul.addr %s51, 16
          %s1892 = scalar_lea.hbm %s18, %s1891
          %s1894 = sshll.u32 %s1884, 4
          %s1895 = int_to_ptr.vmem [resolvable:$true] %s1894
          %1897 = dma.vmem_to_hbm [thread:$0]  %s1895, 16, %s1892, %s1882
        $region140: #{tpu_custom_call.1} parent=91 // pred_fallthru
          _
      $region92: #{tpu_custom_call.1} parent=5 // pred_fallthru
        _
      %p1898 = scmp.le.s32.totalorder 2, %s42
      // Predicated region
      $region141: #{tpu_custom_call.1} parent=5 // pred_check
        %p1899 = pneg %p1898
      $region142: #{tpu_custom_call.1} parent=5 // pred_check_branch
        %1901 = sbr.rel (%p1899) target = $region144
      $region143: #{tpu_custom_call.1} parent=5 // pred_region
        %s1902 = ssub.s32 %s42, 2
        // Predicated region
        $region145: #{tpu_custom_call.1} parent=143 // pred_check
          %p1903 = pneg %p531
        $region146: #{tpu_custom_call.1} parent=143 // pred_check_branch
          %1905 = sbr.rel (%p1903) target = $region148
        $region147: #{tpu_custom_call.1} parent=143 // pred_region
          %s1906 = sand.u32 %s516, 1
          %s1907 = scalar_lea.sflag [#allocation5], %s1906
          %s1908 = sand.u32 %s516, 1
          %s1909 = scalar_lea.vmem [#allocation18], %s1908
          %1910 = dma.done %s1907, 16
        $region148: #{tpu_custom_call.1} parent=143 // pred_fallthru
          _
      $region144: #{tpu_custom_call.1} parent=5 // pred_fallthru
        _
    $region6: #{tpu_custom_call.1} parent=1 // loop_footer
      %s46 = sadd.s32 1, %s42
    $region7: #{tpu_custom_call.1} parent=1 // loop_footer_branch
      %41 = sbr.rel target = $region3
    $region8: #{tpu_custom_call.1} parent=1 // loop_exit
      _
    %1911 = vsyncpa [#allocation4], 1
    %s1912 = scalar_lea.sflag [#allocation4], 1
    %1913 = vsyncpa %s1912, 1
    %1914 = vsyncpa [#allocation7], 1
    %s1915 = scalar_lea.sflag [#allocation7], 1
    %1916 = vsyncpa %s1915, 1
    %1917 = vsyncpa [#allocation10], 1
    %s1918 = scalar_lea.sflag [#allocation10], 1
    %1919 = vsyncpa %s1918, 1
    %1920 = vsyncpa [#allocation13], 1
    %s1921 = scalar_lea.sflag [#allocation13], 1
    %1922 = vsyncpa %s1921, 1
    %1923 = vsyncpa [#allocation16], 1
    %s1924 = scalar_lea.sflag [#allocation16], 1
    %1925 = vsyncpa %s1924, 1
    %1926 = vsyncpa [#allocation5], 1
    %s1927 = scalar_lea.sflag [#allocation5], 1
    %1928 = vsyncpa %s1927, 1

</llo_original>
